<compile_context>
chip_gen: v6e
topology: v6e:2x2x1
jax: 0.10.0
libtpu: 0.0.40
codegen_flags: <defaults>
</compile_context>

<pallas_src>
import functools
import math

import jax
import jax.numpy as jnp
from jax import lax
from jax.experimental import pallas as pl
from jax.experimental.pallas import tpu as pltpu

_VMEM_LIMIT_BYTES = 64 * 1024 * 1024


def _pick_tile(dim, pref, mult):
    """Largest multiple of `mult` that divides `dim` and is <= pref, else `dim`."""
    cap = min(pref, dim)
    for cand in range(cap - cap % mult, 0, -mult):
        if dim % cand == 0:
            return cand
    return dim  # full-extent block (always legal)


# ----------------------------------------------------------------------------
# Kernel 1: tiled dense linear layer  y = x @ W + b
# ----------------------------------------------------------------------------
def _linear_kernel(x_ref, w_ref, b_ref, o_ref, acc_ref):
    @pl.when(pl.program_id(2) == 0)
    def _init():
        acc_ref[...] = jnp.zeros(acc_ref.shape, dtype=acc_ref.dtype)

    acc_ref[...] += jnp.dot(x_ref[...], w_ref[...],
                            preferred_element_type=jnp.float32)

    @pl.when(pl.program_id(2) == pl.num_programs(2) - 1)
    def _finalize():
        out = acc_ref[...] + b_ref[...].astype(jnp.float32)
        o_ref[...] = out.astype(o_ref.dtype)


def linear(x2d, w, b):
    """x2d: [M, K], w: [K, N], b: [N] -> [M, N]."""
    M, K = x2d.shape
    K2, N = w.shape
    assert K == K2 and b.shape == (N,)
    # 128-multiple tiles (MXU / store friendly on all generations), sized big
    # enough to amortize per-step pipeline overhead; vmem_limit raised below.
    tm = _pick_tile(M, 512, 128)
    tn = _pick_tile(N, 512, 128)
    tk = _pick_tile(K, 1024, 128)
    b2d = b.reshape(1, N)
    itemsize = jnp.dtype(x2d.dtype).itemsize
    cost = pl.CostEstimate(
        flops=2 * M * N * K,
        transcendentals=0,
        bytes_accessed=(M * K + K * N + M * N + N) * itemsize,
    )
    return pl.pallas_call(
        _linear_kernel,
        out_shape=jax.ShapeDtypeStruct((M, N), x2d.dtype),
        grid=(M // tm, N // tn, K // tk),
        in_specs=[
            pl.BlockSpec((tm, tk), lambda i, j, k: (i, k)),
            pl.BlockSpec((tk, tn), lambda i, j, k: (k, j)),
            pl.BlockSpec((1, tn), lambda i, j, k: (0, j)),
        ],
        out_specs=pl.BlockSpec((tm, tn), lambda i, j, k: (i, j)),
        scratch_shapes=[pltpu.VMEM((tm, tn), jnp.float32)],
        compiler_params=pltpu.CompilerParams(
            dimension_semantics=("parallel", "parallel", "arbitrary"),
            vmem_limit_bytes=_VMEM_LIMIT_BYTES),
        cost_estimate=cost,
    )(x2d, w, b2d)


# ----------------------------------------------------------------------------
# Kernel 2: flash-style causal attention over packed qkv = [B, T, 3C]
# ----------------------------------------------------------------------------
def _flash_attn_kernel(q_ref, k_ref, v_ref, o_ref, m_sc, l_sc, acc_sc, *,
                       block, n_head, head_dim, scale, approx_recip):
    qi = pl.program_id(1)

    # Fresh per-q-block state (no cross-grid-step carry).
    m_sc[...] = jnp.full(m_sc.shape, -jnp.inf, dtype=m_sc.dtype)
    l_sc[...] = jnp.zeros(l_sc.shape, dtype=l_sc.dtype)
    acc_sc[...] = jnp.zeros(acc_sc.shape, dtype=acc_sc.dtype)

    # Scale q ONCE per q block (block x C elems), not the (block x block)
    # score tensor per kv step.
    q = q_ref[0] * scale                               # (block, C), input dtype

    def process_chunk(start, mask2d):
        k_chunk = k_ref[0, pl.ds(start, block), :]     # (block, C)
        v_chunk = v_ref[0, pl.ds(start, block), :]     # (block, C)
        for h in range(n_head):                        # static, unrolled
            lo = h * head_dim
            hi = lo + head_dim
            q_h = q[:, lo:hi]                          # (block, hd)
            k_h = k_chunk[:, lo:hi]                    # (block, hd)
            # QK^T in input dtype, f32 accumulation on the MXU.
            s = lax.dot_general(q_h, k_h, (((1,), (1,)), ((), ())),
                                preferred_element_type=jnp.float32)
            if mask2d is not None:                     # diagonal chunk only
                s = jnp.where(mask2d, s, jnp.float32(-1e30))
            m_prev = m_sc[h]                                     # (block, 1)
            m_new = jnp.maximum(m_prev, jnp.max(s, axis=-1, keepdims=True))
            alpha = jnp.exp(m_prev - m_new)
            p = jnp.exp(s - m_new)                               # f32
            l_sc[h] = alpha * l_sc[h] + jnp.sum(p, axis=-1, keepdims=True)
            acc_sc[h] = alpha * acc_sc[h] + jnp.dot(
                p.astype(v_chunk.dtype), v_chunk[:, lo:hi],
                preferred_element_type=jnp.float32)
            m_sc[h] = m_new

    # Chunks strictly below the diagonal: no mask needed.  Chunks above the
    # diagonal are never visited (no DMA, no grid step, no per-step overhead).
    def body(j, carry):
        process_chunk(pl.multiple_of(j * block, block), None)
        return carry

    lax.fori_loop(0, qi, body, 0)

    # Diagonal chunk: single 2-D (block, block) causal mask shared by all
    # heads (the qi*block row/col offsets cancel on the diagonal).
    row = lax.broadcasted_iota(jnp.int32, (block, block), 0)
    col = lax.broadcasted_iota(jnp.int32, (block, block), 1)
    process_chunk(pl.multiple_of(qi * block, block), row >= col)

    # Finalize: normalize and emit a lane-dense (block, C) tile.
    for h in range(n_head):
        if approx_recip:
            inv_l = pl.reciprocal(l_sc[h], approx=True)
        else:
            inv_l = 1.0 / l_sc[h]
        lo = h * head_dim
        o_ref[0, :, lo:lo + head_dim] = (acc_sc[h] * inv_l).astype(o_ref.dtype)


def flash_causal_attention(qkv, n_head, *, block=None, approx_recip=True):
    """qkv: [B, T, 3C] packed as [Q | K | V] (c_attn output) -> y: [B, T, C].

    Heads are split in-kernel; the output already has heads merged along the
    last axis, so c_proj consumes it with no HBM transposes.
    """
    B, T, C3 = qkv.shape
    C = C3 // 3
    assert C % n_head == 0 and C3 == 3 * C
    head_dim = C // n_head
    if block is None:
        block = _pick_tile(T, 256, 128)    # 128-multiples; capped for VMEM (v7x)
    assert T % block == 0
    nblk = T // block
    scale = 1.0 / math.sqrt(head_dim)

    kernel = functools.partial(
        _flash_attn_kernel, block=block, n_head=n_head, head_dim=head_dim,
        scale=scale, approx_recip=approx_recip)

    # q streams one (block, C) tile per grid step; K and V are the full-T
    # slices of qkv with an index_map constant in qi, so they are fetched once
    # per batch and stay resident in VMEM across all q blocks of that batch.
    q_spec = pl.BlockSpec((1, block, C), lambda b, qi: (b, qi, 0))
    k_spec = pl.BlockSpec((1, T, C), lambda b, qi: (b, 0, 1))
    v_spec = pl.BlockSpec((1, T, C), lambda b, qi: (b, 0, 2))
    o_spec = pl.BlockSpec((1, block, C), lambda b, qi: (b, qi, 0))

    itemsize = jnp.dtype(qkv.dtype).itemsize
    cost = pl.CostEstimate(
        flops=2 * B * n_head * T * T * head_dim,          # QK^T + PV, causal half
        transcendentals=B * n_head * T * T // 2,
        bytes_accessed=(B * T * 3 * C + B * T * C) * itemsize,
    )

    return pl.pallas_call(
        kernel,
        out_shape=jax.ShapeDtypeStruct((B, T, C), qkv.dtype),
        grid=(B, nblk),
        in_specs=[q_spec, k_spec, v_spec],
        out_specs=o_spec,
        scratch_shapes=[
            pltpu.VMEM((n_head, block, 1), jnp.float32),          # running max
            pltpu.VMEM((n_head, block, 1), jnp.float32),          # running sum
            pltpu.VMEM((n_head, block, head_dim), jnp.float32),   # accumulator
        ],
        compiler_params=pltpu.CompilerParams(
            dimension_semantics=("parallel", "parallel"),
            vmem_limit_bytes=_VMEM_LIMIT_BYTES),
        cost_estimate=cost,
    )(qkv, qkv, qkv)


# ----------------------------------------------------------------------------
# Full module forward
# ----------------------------------------------------------------------------
def causal_self_attention(x, params, n_head, *, attn_block=None,
                          compute_dtype=None, approx_recip=True):
    """x: [B, T, C] -> [B, T, C].

    compute_dtype=jnp.bfloat16 casts activations/weights once at the boundary
    (f32 accumulation is kept inside the kernels) for v6e/v7x MXU throughput.
    """
    B, T, C = x.shape
    if compute_dtype is not None:
        x = x.astype(compute_dtype)
        params = {k: v.astype(compute_dtype) for k, v in params.items()}

    x2d = x.reshape(B * T, C)
    # c_attn: [B*T, 3C], kept packed -- no HBM-level head split/transposes.
    qkv = linear(x2d, params["w_attn"], params["b_attn"]).reshape(B, T, 3 * C)
    y = flash_causal_attention(qkv, n_head, block=attn_block,
                               approx_recip=approx_recip)          # [B, T, C]
    # c_proj consumes the lane-dense attention output directly.
    y2d = linear(y.reshape(B * T, C), params["w_proj"], params["b_proj"])
    # TODO(synk): training-mode attn/resid dropout not implemented (eval = identity).
    return y2d.reshape(B, T, C)


# ----------------------------------------------------------------------------
# Pure-JAX reference for a sanity check
# ----------------------------------------------------------------------------
def reference(x, params, n_head):
    B, T, C = x.shape
    hd = C // n_head
    qkv = x @ params["w_attn"] + params["b_attn"]
    wq, wk, wv = jnp.split(qkv, 3, axis=2)
    q = wq.reshape(B, T, n_head, hd).transpose(0, 2, 1, 3)
    k = wk.reshape(B, T, n_head, hd).transpose(0, 2, 1, 3)
    v = wv.reshape(B, T, n_head, hd).transpose(0, 2, 1, 3)
    s = jnp.einsum("bhqd,bhkd->bhqk", q, k) / math.sqrt(hd)
    mask = jnp.tril(jnp.ones((T, T), dtype=bool))
    s = jnp.where(mask[None, None], s, -1e30)
    p = jax.nn.softmax(s, axis=-1)
    y = jnp.einsum("bhqk,bhkd->bhqd", p, v)
    y = y.transpose(0, 2, 1, 3).reshape(B, T, C)
    return y @ params["w_proj"] + params["b_proj"]


if __name__ == "__main__":
    # Small config: n_embd=128, n_head=4, T=256, batch=2.
    B, T, C, H = 2, 256, 128, 4
    key = jax.random.PRNGKey(0)
    kx, k1, k2, k3, k4 = jax.random.split(key, 5)

    x = jax.random.normal(kx, (B, T, C), dtype=jnp.float32)
    params = {
        # c_attn: nn.Linear(C, 3C) -- stored transposed as [C, 3C]
        "w_attn": jax.random.normal(k1, (C, 3 * C), dtype=jnp.float32) * 0.02,
        "b_attn": jax.random.normal(k2, (3 * C,), dtype=jnp.float32) * 0.02,
        # c_proj: nn.Linear(C, C) -- stored transposed as [C, C]
        "w_proj": jax.random.normal(k3, (C, C), dtype=jnp.float32) * 0.02,
        "b_proj": jax.random.normal(k4, (C,), dtype=jnp.float32) * 0.02,
    }

    y_ref = reference(x, params, H)

    # f32 path; attn_block=128 -> T/block = 2 so both the unmasked
    # below-diagonal kv loop and the masked diagonal chunk are exercised.
    y = jax.block_until_ready(
        causal_self_attention(x, params, H, attn_block=128))
    max_err = float(jnp.max(jnp.abs(y - y_ref)))
    assert jnp.allclose(y, y_ref, atol=5e-3, rtol=5e-3), (
        f"f32 mismatch vs reference (max abs err {max_err})")

    # bf16 operand path (v6e/v7x MXU feed); same kernels, looser tolerance.
    y_bf16 = jax.block_until_ready(
        causal_self_attention(x, params, H, attn_block=128,
                              compute_dtype=jnp.bfloat16))
    max_err_bf16 = float(jnp.max(jnp.abs(y_bf16.astype(jnp.float32) - y_ref)))
    assert max_err_bf16 < 3e-2, (
        f"bf16 mismatch vs reference (max abs err {max_err_bf16})")

    print("KERNEL_OK")
</pallas_src>

<mosaic_0001>
module attributes {stable_mosaic.version = 11 : i64} {
  func.func @_linear_kernel(%arg0: i32, %arg1: i32, %arg2: i32, %arg3: memref<512x128xf32, #tpu.memory_space<vmem>>, %arg4: memref<128x384xf32, #tpu.memory_space<vmem>>, %arg5: memref<1x384xf32, #tpu.memory_space<vmem>>, %arg6: memref<512x384xf32, #tpu.memory_space<vmem>>, %arg7: memref<512x384xf32, #tpu.memory_space<vmem>>) attributes {dimension_semantics = [#tpu.dimension_semantics<parallel>, #tpu.dimension_semantics<parallel>, #tpu.dimension_semantics<arbitrary>], iteration_bounds = array<i64: 1, 1, 1>, scalar_prefetch = 0 : i64, scratch_operands = 1 : i64, tpu.core_type = #tpu.core_type<tc>, window_params = [{transform_indices = @transform_0, window_bounds = array<i64: 512, 128>}, {transform_indices = @transform_1, window_bounds = array<i64: 128, 384>}, {transform_indices = @transform_2, window_bounds = array<i64: 1, 384>}, {transform_indices = @transform_3, window_bounds = array<i64: 512, 384>}]} {
    %c0_i32 = arith.constant 0 : i32
    %0 = arith.cmpi eq, %arg2, %c0_i32 : i32
    %1 = arith.extui %0 : i1 to i32
    %c0_i32_0 = arith.constant 0 : i32
    %2 = arith.cmpi ne, %1, %c0_i32_0 : i32
    scf.if %2 {
      %cst_10 = arith.constant 0.000000e+00 : f32
      %12 = vector.broadcast %cst_10 : f32 to vector<512x384xf32>
      %c0_11 = arith.constant 0 : index
      %c0_12 = arith.constant 0 : index
      %13 = vector.load %arg7[%c0_11, %c0_12] : memref<512x384xf32, #tpu.memory_space<vmem>>, vector<512x384xf32>
      tpu.vector_store %arg7[%c0_11, %c0_12], %12 {strides = array<i32>} : memref<512x384xf32, #tpu.memory_space<vmem>>, vector<512x384xf32>,
    } else {
    }
    %c0 = arith.constant 0 : index
    %c0_1 = arith.constant 0 : index
    %3 = vector.load %arg7[%c0, %c0_1] : memref<512x384xf32, #tpu.memory_space<vmem>>, vector<512x384xf32>
    %c0_2 = arith.constant 0 : index
    %c0_3 = arith.constant 0 : index
    %4 = vector.load %arg3[%c0_2, %c0_3] : memref<512x128xf32, #tpu.memory_space<vmem>>, vector<512x128xf32>
    %c0_4 = arith.constant 0 : index
    %c0_5 = arith.constant 0 : index
    %5 = vector.load %arg4[%c0_4, %c0_5] : memref<128x384xf32, #tpu.memory_space<vmem>>, vector<128x384xf32>
    %cst = arith.constant dense<0.000000e+00> : vector<512x384xf32>
    %6 = tpu.matmul %4, %5, %cst {dimension_numbers = #tpu.dot_dimension_numbers<[1], [0], [0], [1], [0, 0, 1, 1], [], []>} : vector<512x128xf32>, vector<128x384xf32>, vector<512x384xf32> -> vector<512x384xf32>
    %7 = arith.addf %3, %6 : vector<512x384xf32>
    %c0_6 = arith.constant 0 : index
    %c0_7 = arith.constant 0 : index
    %8 = vector.load %arg7[%c0_6, %c0_7] : memref<512x384xf32, #tpu.memory_space<vmem>>, vector<512x384xf32>
    tpu.vector_store %arg7[%c0_6, %c0_7], %7 {strides = array<i32>} : memref<512x384xf32, #tpu.memory_space<vmem>>, vector<512x384xf32>,
    %c0_i32_8 = arith.constant 0 : i32
    %9 = arith.cmpi eq, %arg2, %c0_i32_8 : i32
    %10 = arith.extui %9 : i1 to i32
    %c0_i32_9 = arith.constant 0 : i32
    %11 = arith.cmpi ne, %10, %c0_i32_9 : i32
    scf.if %11 {
      %c0_10 = arith.constant 0 : index
      %c0_11 = arith.constant 0 : index
      %12 = vector.load %arg7[%c0_10, %c0_11] : memref<512x384xf32, #tpu.memory_space<vmem>>, vector<512x384xf32>
      %c0_12 = arith.constant 0 : index
      %c0_13 = arith.constant 0 : index
      %13 = vector.load %arg5[%c0_12, %c0_13] : memref<1x384xf32, #tpu.memory_space<vmem>>, vector<1x384xf32>
      %14 = vector.broadcast %13 : vector<1x384xf32> to vector<512x384xf32>
      %15 = arith.addf %12, %14 : vector<512x384xf32>
      %c0_14 = arith.constant 0 : index
      %c0_15 = arith.constant 0 : index
      %16 = vector.load %arg6[%c0_14, %c0_15] : memref<512x384xf32, #tpu.memory_space<vmem>>, vector<512x384xf32>
      tpu.vector_store %arg6[%c0_14, %c0_15], %15 {strides = array<i32>} : memref<512x384xf32, #tpu.memory_space<vmem>>, vector<512x384xf32>,
    } else {
    }
    return
  }
  func.func @transform_0(%arg0: i32, %arg1: i32, %arg2: i32) -> (i32, i32) {
    %c0_i32 = arith.constant 0 : i32
    return %arg0, %arg2 : i32, i32
  }
  func.func @transform_1(%arg0: i32, %arg1: i32, %arg2: i32) -> (i32, i32) {
    %c0_i32 = arith.constant 0 : i32
    return %arg2, %arg1 : i32, i32
  }
  func.func @transform_2(%arg0: i32, %arg1: i32, %arg2: i32) -> (i32, i32) {
    %c0_i32 = arith.constant 0 : i32
    %c0_i32_0 = arith.constant 0 : i32
    return %c0_i32, %arg1 : i32, i32
  }
  func.func @transform_3(%arg0: i32, %arg1: i32, %arg2: i32) -> (i32, i32) {
    %c0_i32 = arith.constant 0 : i32
    return %arg0, %arg1 : i32, i32
  }
}

</mosaic_0001>

<llo_original>
// kernel: tpu_custom_call.1
$region0: #{tpu_custom_call.1}
  #allocation0 [shape = 'u32[]', space=smem, size = 0x4, offset = 0x4, fixed_abs, tag = 'smem constant byte address 0x4 - core index']
  #allocation1 [shape = 'u32[144,128]{1,0:T(1,128)}', space=vmem, size = 0x12000, scoped, tag = 'internal scratch']
  #allocation2 [shape = 'f32[512,384]{1,0:T(8,128)}', space=vmem, size = 0xc0000, scoped, tag = 'scratch operand']
  %s0 = inlined_call_operand.hbm [shape: f32[512,128], index: 0, kind: input, shape index: {}]
  %s1 = inlined_call_operand.hbm [shape: f32[128,384], index: 1, kind: input, shape index: {}]
  %s2 = inlined_call_operand.vmem [shape: f32[1,384], index: 2, kind: input, shape index: {}]
  %s3 = inlined_call_operand.hbm [shape: f32[512,384], index: 3, kind: output, shape index: {}]
  %s4 = sld [smem:[#allocation0]]
  $region38: #{tpu_custom_call.1} parent=0
    _
  %s6 = ssub.s32 1, %s4
  %s7 = scalar_select 0, %s6, %s4
  $region1: #{tpu_custom_call.1} parent=0
    #allocation3 [shape = 'u8[262144]{0}', space=vmem, size = 0x40000, scoped, tag = 'input window, operand 0, single buffered']
    #allocation4 [shape = 's32[1]{0}', space=sflag, size = 0x4, scoped, tag = 'scoped memory for tpu_custom_call.1']
    #allocation5 [shape = 's32[1]{0}', space=sflag, size = 0x4, scoped, tag = 'scoped memory for tpu_custom_call.1']
    #allocation6 [shape = 'u8[196608]{0}', space=vmem, size = 0x30000, scoped, tag = 'input window, operand 1, single buffered']
    #allocation7 [shape = 's32[1]{0}', space=sflag, size = 0x4, scoped, tag = 'scoped memory for tpu_custom_call.1']
    #allocation8 [shape = 'u8[786432]{0}', space=vmem, size = 0xc0000, scoped, tag = 'output window, operand 0, single buffered']
    %8 = vsyncpa [#allocation4], 0
    %9 = vsyncpa [#allocation7], 0
    %10 = vsyncpa [#allocation5], 0
    // Predicated region
    $region2: #{tpu_custom_call.1} parent=1 // pred_check
      _
    $region3: #{tpu_custom_call.1} parent=1 // pred_check_branch
      %12 = sbr.rel (0) target = $region5
    $region4: #{tpu_custom_call.1} parent=1 // pred_region
      %s14 = ssub.s32 8192, 8192
      %15 = vsyncadd [#allocation4], %s14
      %s16 = sshll.u32 [#allocation3], 4
      %s17 = int_to_ptr.vmem [resolvable:$true] %s16
      %22 = dma.hbm_to_vmem [thread:$0]  %s0, 8192, %s17, [#allocation4], 128, 128, 8
    $region5: #{tpu_custom_call.1} parent=1 // pred_fallthru
      _
    // Predicated region
    $region6: #{tpu_custom_call.1} parent=1 // pred_check
      _
    $region7: #{tpu_custom_call.1} parent=1 // pred_check_branch
      %24 = sbr.rel (0) target = $region9
    $region8: #{tpu_custom_call.1} parent=1 // pred_region
      %s26 = ssub.s32 6144, 6144
      %27 = vsyncadd [#allocation7], %s26
      %s28 = sshll.u32 [#allocation6], 4
      %s29 = int_to_ptr.vmem [resolvable:$true] %s28
      %34 = dma.hbm_to_vmem [thread:$0]  %s1, 6144, %s29, [#allocation7], 384, 384, 24
    $region9: #{tpu_custom_call.1} parent=1 // pred_fallthru
      _
    // Predicated region
    $region10: #{tpu_custom_call.1} parent=1 // pred_check
      _
    $region11: #{tpu_custom_call.1} parent=1 // pred_check_branch
      %36 = sbr.rel (0) target = $region13
    $region12: #{tpu_custom_call.1} parent=1 // pred_region
      _
    $region13: #{tpu_custom_call.1} parent=1 // pred_fallthru
      _
    // Predicated region
    $region14: #{tpu_custom_call.1} parent=1 // pred_check
      _
    $region15: #{tpu_custom_call.1} parent=1 // pred_check_branch
      %38 = sbr.rel (0) target = $region17
    $region16: #{tpu_custom_call.1} parent=1 // pred_region
      %39 = dma.done [#allocation4], 8192
    $region17: #{tpu_custom_call.1} parent=1 // pred_fallthru
      _
    // Predicated region
    $region18: #{tpu_custom_call.1} parent=1 // pred_check
      _
    $region19: #{tpu_custom_call.1} parent=1 // pred_check_branch
      %41 = sbr.rel (0) target = $region21
    $region20: #{tpu_custom_call.1} parent=1 // pred_region
      %42 = dma.done [#allocation7], 6144
    $region21: #{tpu_custom_call.1} parent=1 // pred_fallthru
      _
    %p43 = scmp.eq.s32.totalorder 0, 0
    // Predicated region
    $region22: #{tpu_custom_call.1} parent=1 // pred_check
      %p44 = pneg %p43
    $region23: #{tpu_custom_call.1} parent=1 // pred_check_branch
      %46 = sbr.rel (%p44) target = $region25
    $region24: #{tpu_custom_call.1} parent=1 // pred_region
      %47 = vst [vmem:[#allocation2] sm:$0xff] 0.0
      %48 = vst [vmem:[#allocation2 + $0x8] sm:$0xff] 0.0
      %49 = vst [vmem:[#allocation2 + $0x10] sm:$0xff] 0.0
      %50 = vst [vmem:[#allocation2 + $0x18] sm:$0xff] 0.0
      %51 = vst [vmem:[#allocation2 + $0x20] sm:$0xff] 0.0
      %52 = vst [vmem:[#allocation2 + $0x28] sm:$0xff] 0.0
      %53 = vst [vmem:[#allocation2 + $0x30] sm:$0xff] 0.0
      %54 = vst [vmem:[#allocation2 + $0x38] sm:$0xff] 0.0
      %55 = vst [vmem:[#allocation2 + $0x40] sm:$0xff] 0.0
      %56 = vst [vmem:[#allocation2 + $0x48] sm:$0xff] 0.0
      %57 = vst [vmem:[#allocation2 + $0x50] sm:$0xff] 0.0
      %58 = vst [vmem:[#allocation2 + $0x58] sm:$0xff] 0.0
      %59 = vst [vmem:[#allocation2 + $0x60] sm:$0xff] 0.0
      %60 = vst [vmem:[#allocation2 + $0x68] sm:$0xff] 0.0
      %61 = vst [vmem:[#allocation2 + $0x70] sm:$0xff] 0.0
      %62 = vst [vmem:[#allocation2 + $0x78] sm:$0xff] 0.0
      %63 = vst [vmem:[#allocation2 + $0x80] sm:$0xff] 0.0
      %64 = vst [vmem:[#allocation2 + $0x88] sm:$0xff] 0.0
      %65 = vst [vmem:[#allocation2 + $0x90] sm:$0xff] 0.0
      %66 = vst [vmem:[#allocation2 + $0x98] sm:$0xff] 0.0
      %67 = vst [vmem:[#allocation2 + $0xa0] sm:$0xff] 0.0
      %68 = vst [vmem:[#allocation2 + $0xa8] sm:$0xff] 0.0
      %69 = vst [vmem:[#allocation2 + $0xb0] sm:$0xff] 0.0
      %70 = vst [vmem:[#allocation2 + $0xb8] sm:$0xff] 0.0
      %71 = vst [vmem:[#allocation2 + $0xc0] sm:$0xff] 0.0
      %72 = vst [vmem:[#allocation2 + $0xc8] sm:$0xff] 0.0
      %73 = vst [vmem:[#allocation2 + $0xd0] sm:$0xff] 0.0
      %74 = vst [vmem:[#allocation2 + $0xd8] sm:$0xff] 0.0
      %75 = vst [vmem:[#allocation2 + $0xe0] sm:$0xff] 0.0
      %76 = vst [vmem:[#allocation2 + $0xe8] sm:$0xff] 0.0
      %77 = vst [vmem:[#allocation2 + $0xf0] sm:$0xff] 0.0
      %78 = vst [vmem:[#allocation2 + $0xf8] sm:$0xff] 0.0
      %79 = vst [vmem:[#allocation2 + $0x100] sm:$0xff] 0.0
      %80 = vst [vmem:[#allocation2 + $0x108] sm:$0xff] 0.0
      %81 = vst [vmem:[#allocation2 + $0x110] sm:$0xff] 0.0
      %82 = vst [vmem:[#allocation2 + $0x118] sm:$0xff] 0.0
      %83 = vst [vmem:[#allocation2 + $0x120] sm:$0xff] 0.0
      %84 = vst [vmem:[#allocation2 + $0x128] sm:$0xff] 0.0
      %85 = vst [vmem:[#allocation2 + $0x130] sm:$0xff] 0.0
      %86 = vst [vmem:[#allocation2 + $0x138] sm:$0xff] 0.0
      %87 = vst [vmem:[#allocation2 + $0x140] sm:$0xff] 0.0
      %88 = vst [vmem:[#allocation2 + $0x148] sm:$0xff] 0.0
      %89 = vst [vmem:[#allocation2 + $0x150] sm:$0xff] 0.0
      %90 = vst [vmem:[#allocation2 + $0x158] sm:$0xff] 0.0
      %91 = vst [vmem:[#allocation2 + $0x160] sm:$0xff] 0.0
      %92 = vst [vmem:[#allocation2 + $0x168] sm:$0xff] 0.0
      %93 = vst [vmem:[#allocation2 + $0x170] sm:$0xff] 0.0
      %94 = vst [vmem:[#allocation2 + $0x178] sm:$0xff] 0.0
      %95 = vst [vmem:[#allocation2 + $0x180] sm:$0xff] 0.0
      %96 = vst [vmem:[#allocation2 + $0x188] sm:$0xff] 0.0
      %97 = vst [vmem:[#allocation2 + $0x190] sm:$0xff] 0.0
      %98 = vst [vmem:[#allocation2 + $0x198] sm:$0xff] 0.0
      %99 = vst [vmem:[#allocation2 + $0x1a0] sm:$0xff] 0.0
      %100 = vst [vmem:[#allocation2 + $0x1a8] sm:$0xff] 0.0
      %101 = vst [vmem:[#allocation2 + $0x1b0] sm:$0xff] 0.0
      %102 = vst [vmem:[#allocation2 + $0x1b8] sm:$0xff] 0.0
      %103 = vst [vmem:[#allocation2 + $0x1c0] sm:$0xff] 0.0
      %104 = vst [vmem:[#allocation2 + $0x1c8] sm:$0xff] 0.0
      %105 = vst [vmem:[#allocation2 + $0x1d0] sm:$0xff] 0.0
      %106 = vst [vmem:[#allocation2 + $0x1d8] sm:$0xff] 0.0
      %107 = vst [vmem:[#allocation2 + $0x1e0] sm:$0xff] 0.0
      %108 = vst [vmem:[#allocation2 + $0x1e8] sm:$0xff] 0.0
      %109 = vst [vmem:[#allocation2 + $0x1f0] sm:$0xff] 0.0
      %110 = vst [vmem:[#allocation2 + $0x1f8] sm:$0xff] 0.0
      %111 = vst [vmem:[#allocation2 + $0x200] sm:$0xff] 0.0
      %112 = vst [vmem:[#allocation2 + $0x208] sm:$0xff] 0.0
      %113 = vst [vmem:[#allocation2 + $0x210] sm:$0xff] 0.0
      %114 = vst [vmem:[#allocation2 + $0x218] sm:$0xff] 0.0
      %115 = vst [vmem:[#allocation2 + $0x220] sm:$0xff] 0.0
      %116 = vst [vmem:[#allocation2 + $0x228] sm:$0xff] 0.0
      %117 = vst [vmem:[#allocation2 + $0x230] sm:$0xff] 0.0
      %118 = vst [vmem:[#allocation2 + $0x238] sm:$0xff] 0.0
      %119 = vst [vmem:[#allocation2 + $0x240] sm:$0xff] 0.0
      %120 = vst [vmem:[#allocation2 + $0x248] sm:$0xff] 0.0
      %121 = vst [vmem:[#allocation2 + $0x250] sm:$0xff] 0.0
      %122 = vst [vmem:[#allocation2 + $0x258] sm:$0xff] 0.0
      %123 = vst [vmem:[#allocation2 + $0x260] sm:$0xff] 0.0
      %124 = vst [vmem:[#allocation2 + $0x268] sm:$0xff] 0.0
      %125 = vst [vmem:[#allocation2 + $0x270] sm:$0xff] 0.0
      %126 = vst [vmem:[#allocation2 + $0x278] sm:$0xff] 0.0
      %127 = vst [vmem:[#allocation2 + $0x280] sm:$0xff] 0.0
      %128 = vst [vmem:[#allocation2 + $0x288] sm:$0xff] 0.0
      %129 = vst [vmem:[#allocation2 + $0x290] sm:$0xff] 0.0
      %130 = vst [vmem:[#allocation2 + $0x298] sm:$0xff] 0.0
      %131 = vst [vmem:[#allocation2 + $0x2a0] sm:$0xff] 0.0
      %132 = vst [vmem:[#allocation2 + $0x2a8] sm:$0xff] 0.0
      %133 = vst [vmem:[#allocation2 + $0x2b0] sm:$0xff] 0.0
      %134 = vst [vmem:[#allocation2 + $0x2b8] sm:$0xff] 0.0
      %135 = vst [vmem:[#allocation2 + $0x2c0] sm:$0xff] 0.0
      %136 = vst [vmem:[#allocation2 + $0x2c8] sm:$0xff] 0.0
      %137 = vst [vmem:[#allocation2 + $0x2d0] sm:$0xff] 0.0
      %138 = vst [vmem:[#allocation2 + $0x2d8] sm:$0xff] 0.0
      %139 = vst [vmem:[#allocation2 + $0x2e0] sm:$0xff] 0.0
      %140 = vst [vmem:[#allocation2 + $0x2e8] sm:$0xff] 0.0
      %141 = vst [vmem:[#allocation2 + $0x2f0] sm:$0xff] 0.0
      %142 = vst [vmem:[#allocation2 + $0x2f8] sm:$0xff] 0.0
      %143 = vst [vmem:[#allocation2 + $0x300] sm:$0xff] 0.0
      %144 = vst [vmem:[#allocation2 + $0x308] sm:$0xff] 0.0
      %145 = vst [vmem:[#allocation2 + $0x310] sm:$0xff] 0.0
      %146 = vst [vmem:[#allocation2 + $0x318] sm:$0xff] 0.0
      %147 = vst [vmem:[#allocation2 + $0x320] sm:$0xff] 0.0
      %148 = vst [vmem:[#allocation2 + $0x328] sm:$0xff] 0.0
      %149 = vst [vmem:[#allocation2 + $0x330] sm:$0xff] 0.0
      %150 = vst [vmem:[#allocation2 + $0x338] sm:$0xff] 0.0
      %151 = vst [vmem:[#allocation2 + $0x340] sm:$0xff] 0.0
      %152 = vst [vmem:[#allocation2 + $0x348] sm:$0xff] 0.0
      %153 = vst [vmem:[#allocation2 + $0x350] sm:$0xff] 0.0
      %154 = vst [vmem:[#allocation2 + $0x358] sm:$0xff] 0.0
      %155 = vst [vmem:[#allocation2 + $0x360] sm:$0xff] 0.0
      %156 = vst [vmem:[#allocation2 + $0x368] sm:$0xff] 0.0
      %157 = vst [vmem:[#allocation2 + $0x370] sm:$0xff] 0.0
      %158 = vst [vmem:[#allocation2 + $0x378] sm:$0xff] 0.0
      %159 = vst [vmem:[#allocation2 + $0x380] sm:$0xff] 0.0
      %160 = vst [vmem:[#allocation2 + $0x388] sm:$0xff] 0.0
      %161 = vst [vmem:[#allocation2 + $0x390] sm:$0xff] 0.0
      %162 = vst [vmem:[#allocation2 + $0x398] sm:$0xff] 0.0
      %163 = vst [vmem:[#allocation2 + $0x3a0] sm:$0xff] 0.0
      %164 = vst [vmem:[#allocation2 + $0x3a8] sm:$0xff] 0.0
      %165 = vst [vmem:[#allocation2 + $0x3b0] sm:$0xff] 0.0
      %166 = vst [vmem:[#allocation2 + $0x3b8] sm:$0xff] 0.0
      %167 = vst [vmem:[#allocation2 + $0x3c0] sm:$0xff] 0.0
      %168 = vst [vmem:[#allocation2 + $0x3c8] sm:$0xff] 0.0
      %169 = vst [vmem:[#allocation2 + $0x3d0] sm:$0xff] 0.0
      %170 = vst [vmem:[#allocation2 + $0x3d8] sm:$0xff] 0.0
      %171 = vst [vmem:[#allocation2 + $0x3e0] sm:$0xff] 0.0
      %172 = vst [vmem:[#allocation2 + $0x3e8] sm:$0xff] 0.0
      %173 = vst [vmem:[#allocation2 + $0x3f0] sm:$0xff] 0.0
      %174 = vst [vmem:[#allocation2 + $0x3f8] sm:$0xff] 0.0
      %175 = vst [vmem:[#allocation2 + $0x400] sm:$0xff] 0.0
      %176 = vst [vmem:[#allocation2 + $0x408] sm:$0xff] 0.0
      %177 = vst [vmem:[#allocation2 + $0x410] sm:$0xff] 0.0
      %178 = vst [vmem:[#allocation2 + $0x418] sm:$0xff] 0.0
      %179 = vst [vmem:[#allocation2 + $0x420] sm:$0xff] 0.0
      %180 = vst [vmem:[#allocation2 + $0x428] sm:$0xff] 0.0
      %181 = vst [vmem:[#allocation2 + $0x430] sm:$0xff] 0.0
      %182 = vst [vmem:[#allocation2 + $0x438] sm:$0xff] 0.0
      %183 = vst [vmem:[#allocation2 + $0x440] sm:$0xff] 0.0
      %184 = vst [vmem:[#allocation2 + $0x448] sm:$0xff] 0.0
      %185 = vst [vmem:[#allocation2 + $0x450] sm:$0xff] 0.0
      %186 = vst [vmem:[#allocation2 + $0x458] sm:$0xff] 0.0
      %187 = vst [vmem:[#allocation2 + $0x460] sm:$0xff] 0.0
      %188 = vst [vmem:[#allocation2 + $0x468] sm:$0xff] 0.0
      %189 = vst [vmem:[#allocation2 + $0x470] sm:$0xff] 0.0
      %190 = vst [vmem:[#allocation2 + $0x478] sm:$0xff] 0.0
      %191 = vst [vmem:[#allocation2 + $0x480] sm:$0xff] 0.0
      %192 = vst [vmem:[#allocation2 + $0x488] sm:$0xff] 0.0
      %193 = vst [vmem:[#allocation2 + $0x490] sm:$0xff] 0.0
      %194 = vst [vmem:[#allocation2 + $0x498] sm:$0xff] 0.0
      %195 = vst [vmem:[#allocation2 + $0x4a0] sm:$0xff] 0.0
      %196 = vst [vmem:[#allocation2 + $0x4a8] sm:$0xff] 0.0
      %197 = vst [vmem:[#allocation2 + $0x4b0] sm:$0xff] 0.0
      %198 = vst [vmem:[#allocation2 + $0x4b8] sm:$0xff] 0.0
      %199 = vst [vmem:[#allocation2 + $0x4c0] sm:$0xff] 0.0
      %200 = vst [vmem:[#allocation2 + $0x4c8] sm:$0xff] 0.0
      %201 = vst [vmem:[#allocation2 + $0x4d0] sm:$0xff] 0.0
      %202 = vst [vmem:[#allocation2 + $0x4d8] sm:$0xff] 0.0
      %203 = vst [vmem:[#allocation2 + $0x4e0] sm:$0xff] 0.0
      %204 = vst [vmem:[#allocation2 + $0x4e8] sm:$0xff] 0.0
      %205 = vst [vmem:[#allocation2 + $0x4f0] sm:$0xff] 0.0
      %206 = vst [vmem:[#allocation2 + $0x4f8] sm:$0xff] 0.0
      %207 = vst [vmem:[#allocation2 + $0x500] sm:$0xff] 0.0
      %208 = vst [vmem:[#allocation2 + $0x508] sm:$0xff] 0.0
      %209 = vst [vmem:[#allocation2 + $0x510] sm:$0xff] 0.0
      %210 = vst [vmem:[#allocation2 + $0x518] sm:$0xff] 0.0
      %211 = vst [vmem:[#allocation2 + $0x520] sm:$0xff] 0.0
      %212 = vst [vmem:[#allocation2 + $0x528] sm:$0xff] 0.0
      %213 = vst [vmem:[#allocation2 + $0x530] sm:$0xff] 0.0
      %214 = vst [vmem:[#allocation2 + $0x538] sm:$0xff] 0.0
      %215 = vst [vmem:[#allocation2 + $0x540] sm:$0xff] 0.0
      %216 = vst [vmem:[#allocation2 + $0x548] sm:$0xff] 0.0
      %217 = vst [vmem:[#allocation2 + $0x550] sm:$0xff] 0.0
      %218 = vst [vmem:[#allocation2 + $0x558] sm:$0xff] 0.0
      %219 = vst [vmem:[#allocation2 + $0x560] sm:$0xff] 0.0
      %220 = vst [vmem:[#allocation2 + $0x568] sm:$0xff] 0.0
      %221 = vst [vmem:[#allocation2 + $0x570] sm:$0xff] 0.0
      %222 = vst [vmem:[#allocation2 + $0x578] sm:$0xff] 0.0
      %223 = vst [vmem:[#allocation2 + $0x580] sm:$0xff] 0.0
      %224 = vst [vmem:[#allocation2 + $0x588] sm:$0xff] 0.0
      %225 = vst [vmem:[#allocation2 + $0x590] sm:$0xff] 0.0
      %226 = vst [vmem:[#allocation2 + $0x598] sm:$0xff] 0.0
      %227 = vst [vmem:[#allocation2 + $0x5a0] sm:$0xff] 0.0
      %228 = vst [vmem:[#allocation2 + $0x5a8] sm:$0xff] 0.0
      %229 = vst [vmem:[#allocation2 + $0x5b0] sm:$0xff] 0.0
      %230 = vst [vmem:[#allocation2 + $0x5b8] sm:$0xff] 0.0
      %231 = vst [vmem:[#allocation2 + $0x5c0] sm:$0xff] 0.0
      %232 = vst [vmem:[#allocation2 + $0x5c8] sm:$0xff] 0.0
      %233 = vst [vmem:[#allocation2 + $0x5d0] sm:$0xff] 0.0
      %234 = vst [vmem:[#allocation2 + $0x5d8] sm:$0xff] 0.0
      %235 = vst [vmem:[#allocation2 + $0x5e0] sm:$0xff] 0.0
      %236 = vst [vmem:[#allocation2 + $0x5e8] sm:$0xff] 0.0
      %237 = vst [vmem:[#allocation2 + $0x5f0] sm:$0xff] 0.0
      %238 = vst [vmem:[#allocation2 + $0x5f8] sm:$0xff] 0.0
    $region25: #{tpu_custom_call.1} parent=1 // pred_fallthru
      _
    %v239 = vld [vmem:[#allocation2] sm:$0xff]
    %v240 = vld [vmem:[#allocation2 + $0x8] sm:$0xff]
    %v241 = vld [vmem:[#allocation2 + $0x10] sm:$0xff]
    %v242 = vld [vmem:[#allocation2 + $0x18] sm:$0xff]
    %v243 = vld [vmem:[#allocation2 + $0x20] sm:$0xff]
    %v244 = vld [vmem:[#allocation2 + $0x28] sm:$0xff]
    %v245 = vld [vmem:[#allocation2 + $0x30] sm:$0xff]
    %v246 = vld [vmem:[#allocation2 + $0x38] sm:$0xff]
    %v247 = vld [vmem:[#allocation2 + $0x40] sm:$0xff]
    %v248 = vld [vmem:[#allocation2 + $0x48] sm:$0xff]
    %v249 = vld [vmem:[#allocation2 + $0x50] sm:$0xff]
    %v250 = vld [vmem:[#allocation2 + $0x58] sm:$0xff]
    %v251 = vld [vmem:[#allocation2 + $0x60] sm:$0xff]
    %v252 = vld [vmem:[#allocation2 + $0x68] sm:$0xff]
    %v253 = vld [vmem:[#allocation2 + $0x70] sm:$0xff]
    %v254 = vld [vmem:[#allocation2 + $0x78] sm:$0xff]
    %v255 = vld [vmem:[#allocation2 + $0x80] sm:$0xff]
    %v256 = vld [vmem:[#allocation2 + $0x88] sm:$0xff]
    %v257 = vld [vmem:[#allocation2 + $0x90] sm:$0xff]
    %v258 = vld [vmem:[#allocation2 + $0x98] sm:$0xff]
    %v259 = vld [vmem:[#allocation2 + $0xa0] sm:$0xff]
    %v260 = vld [vmem:[#allocation2 + $0xa8] sm:$0xff]
    %v261 = vld [vmem:[#allocation2 + $0xb0] sm:$0xff]
    %v262 = vld [vmem:[#allocation2 + $0xb8] sm:$0xff]
    %v263 = vld [vmem:[#allocation2 + $0xc0] sm:$0xff]
    %v264 = vld [vmem:[#allocation2 + $0xc8] sm:$0xff]
    %v265 = vld [vmem:[#allocation2 + $0xd0] sm:$0xff]
    %v266 = vld [vmem:[#allocation2 + $0xd8] sm:$0xff]
    %v267 = vld [vmem:[#allocation2 + $0xe0] sm:$0xff]
    %v268 = vld [vmem:[#allocation2 + $0xe8] sm:$0xff]
    %v269 = vld [vmem:[#allocation2 + $0xf0] sm:$0xff]
    %v270 = vld [vmem:[#allocation2 + $0xf8] sm:$0xff]
    %v271 = vld [vmem:[#allocation2 + $0x100] sm:$0xff]
    %v272 = vld [vmem:[#allocation2 + $0x108] sm:$0xff]
    %v273 = vld [vmem:[#allocation2 + $0x110] sm:$0xff]
    %v274 = vld [vmem:[#allocation2 + $0x118] sm:$0xff]
    %v275 = vld [vmem:[#allocation2 + $0x120] sm:$0xff]
    %v276 = vld [vmem:[#allocation2 + $0x128] sm:$0xff]
    %v277 = vld [vmem:[#allocation2 + $0x130] sm:$0xff]
    %v278 = vld [vmem:[#allocation2 + $0x138] sm:$0xff]
    %v279 = vld [vmem:[#allocation2 + $0x140] sm:$0xff]
    %v280 = vld [vmem:[#allocation2 + $0x148] sm:$0xff]
    %v281 = vld [vmem:[#allocation2 + $0x150] sm:$0xff]
    %v282 = vld [vmem:[#allocation2 + $0x158] sm:$0xff]
    %v283 = vld [vmem:[#allocation2 + $0x160] sm:$0xff]
    %v284 = vld [vmem:[#allocation2 + $0x168] sm:$0xff]
    %v285 = vld [vmem:[#allocation2 + $0x170] sm:$0xff]
    %v286 = vld [vmem:[#allocation2 + $0x178] sm:$0xff]
    %v287 = vld [vmem:[#allocation2 + $0x180] sm:$0xff]
    %v288 = vld [vmem:[#allocation2 + $0x188] sm:$0xff]
    %v289 = vld [vmem:[#allocation2 + $0x190] sm:$0xff]
    %v290 = vld [vmem:[#allocation2 + $0x198] sm:$0xff]
    %v291 = vld [vmem:[#allocation2 + $0x1a0] sm:$0xff]
    %v292 = vld [vmem:[#allocation2 + $0x1a8] sm:$0xff]
    %v293 = vld [vmem:[#allocation2 + $0x1b0] sm:$0xff]
    %v294 = vld [vmem:[#allocation2 + $0x1b8] sm:$0xff]
    %v295 = vld [vmem:[#allocation2 + $0x1c0] sm:$0xff]
    %v296 = vld [vmem:[#allocation2 + $0x1c8] sm:$0xff]
    %v297 = vld [vmem:[#allocation2 + $0x1d0] sm:$0xff]
    %v298 = vld [vmem:[#allocation2 + $0x1d8] sm:$0xff]
    %v299 = vld [vmem:[#allocation2 + $0x1e0] sm:$0xff]
    %v300 = vld [vmem:[#allocation2 + $0x1e8] sm:$0xff]
    %v301 = vld [vmem:[#allocation2 + $0x1f0] sm:$0xff]
    %v302 = vld [vmem:[#allocation2 + $0x1f8] sm:$0xff]
    %v303 = vld [vmem:[#allocation2 + $0x200] sm:$0xff]
    %v304 = vld [vmem:[#allocation2 + $0x208] sm:$0xff]
    %v305 = vld [vmem:[#allocation2 + $0x210] sm:$0xff]
    %v306 = vld [vmem:[#allocation2 + $0x218] sm:$0xff]
    %v307 = vld [vmem:[#allocation2 + $0x220] sm:$0xff]
    %v308 = vld [vmem:[#allocation2 + $0x228] sm:$0xff]
    %v309 = vld [vmem:[#allocation2 + $0x230] sm:$0xff]
    %v310 = vld [vmem:[#allocation2 + $0x238] sm:$0xff]
    %v311 = vld [vmem:[#allocation2 + $0x240] sm:$0xff]
    %v312 = vld [vmem:[#allocation2 + $0x248] sm:$0xff]
    %v313 = vld [vmem:[#allocation2 + $0x250] sm:$0xff]
    %v314 = vld [vmem:[#allocation2 + $0x258] sm:$0xff]
    %v315 = vld [vmem:[#allocation2 + $0x260] sm:$0xff]
    %v316 = vld [vmem:[#allocation2 + $0x268] sm:$0xff]
    %v317 = vld [vmem:[#allocation2 + $0x270] sm:$0xff]
    %v318 = vld [vmem:[#allocation2 + $0x278] sm:$0xff]
    %v319 = vld [vmem:[#allocation2 + $0x280] sm:$0xff]
    %v320 = vld [vmem:[#allocation2 + $0x288] sm:$0xff]
    %v321 = vld [vmem:[#allocation2 + $0x290] sm:$0xff]
    %v322 = vld [vmem:[#allocation2 + $0x298] sm:$0xff]
    %v323 = vld [vmem:[#allocation2 + $0x2a0] sm:$0xff]
    %v324 = vld [vmem:[#allocation2 + $0x2a8] sm:$0xff]
    %v325 = vld [vmem:[#allocation2 + $0x2b0] sm:$0xff]
    %v326 = vld [vmem:[#allocation2 + $0x2b8] sm:$0xff]
    %v327 = vld [vmem:[#allocation2 + $0x2c0] sm:$0xff]
    %v328 = vld [vmem:[#allocation2 + $0x2c8] sm:$0xff]
    %v329 = vld [vmem:[#allocation2 + $0x2d0] sm:$0xff]
    %v330 = vld [vmem:[#allocation2 + $0x2d8] sm:$0xff]
    %v331 = vld [vmem:[#allocation2 + $0x2e0] sm:$0xff]
    %v332 = vld [vmem:[#allocation2 + $0x2e8] sm:$0xff]
    %v333 = vld [vmem:[#allocation2 + $0x2f0] sm:$0xff]
    %v334 = vld [vmem:[#allocation2 + $0x2f8] sm:$0xff]
    %v335 = vld [vmem:[#allocation2 + $0x300] sm:$0xff]
    %v336 = vld [vmem:[#allocation2 + $0x308] sm:$0xff]
    %v337 = vld [vmem:[#allocation2 + $0x310] sm:$0xff]
    %v338 = vld [vmem:[#allocation2 + $0x318] sm:$0xff]
    %v339 = vld [vmem:[#allocation2 + $0x320] sm:$0xff]
    %v340 = vld [vmem:[#allocation2 + $0x328] sm:$0xff]
    %v341 = vld [vmem:[#allocation2 + $0x330] sm:$0xff]
    %v342 = vld [vmem:[#allocation2 + $0x338] sm:$0xff]
    %v343 = vld [vmem:[#allocation2 + $0x340] sm:$0xff]
    %v344 = vld [vmem:[#allocation2 + $0x348] sm:$0xff]
    %v345 = vld [vmem:[#allocation2 + $0x350] sm:$0xff]
    %v346 = vld [vmem:[#allocation2 + $0x358] sm:$0xff]
    %v347 = vld [vmem:[#allocation2 + $0x360] sm:$0xff]
    %v348 = vld [vmem:[#allocation2 + $0x368] sm:$0xff]
    %v349 = vld [vmem:[#allocation2 + $0x370] sm:$0xff]
    %v350 = vld [vmem:[#allocation2 + $0x378] sm:$0xff]
    %v351 = vld [vmem:[#allocation2 + $0x380] sm:$0xff]
    %v352 = vld [vmem:[#allocation2 + $0x388] sm:$0xff]
    %v353 = vld [vmem:[#allocation2 + $0x390] sm:$0xff]
    %v354 = vld [vmem:[#allocation2 + $0x398] sm:$0xff]
    %v355 = vld [vmem:[#allocation2 + $0x3a0] sm:$0xff]
    %v356 = vld [vmem:[#allocation2 + $0x3a8] sm:$0xff]
    %v357 = vld [vmem:[#allocation2 + $0x3b0] sm:$0xff]
    %v358 = vld [vmem:[#allocation2 + $0x3b8] sm:$0xff]
    %v359 = vld [vmem:[#allocation2 + $0x3c0] sm:$0xff]
    %v360 = vld [vmem:[#allocation2 + $0x3c8] sm:$0xff]
    %v361 = vld [vmem:[#allocation2 + $0x3d0] sm:$0xff]
    %v362 = vld [vmem:[#allocation2 + $0x3d8] sm:$0xff]
    %v363 = vld [vmem:[#allocation2 + $0x3e0] sm:$0xff]
    %v364 = vld [vmem:[#allocation2 + $0x3e8] sm:$0xff]
    %v365 = vld [vmem:[#allocation2 + $0x3f0] sm:$0xff]
    %v366 = vld [vmem:[#allocation2 + $0x3f8] sm:$0xff]
    %v367 = vld [vmem:[#allocation2 + $0x400] sm:$0xff]
    %v368 = vld [vmem:[#allocation2 + $0x408] sm:$0xff]
    %v369 = vld [vmem:[#allocation2 + $0x410] sm:$0xff]
    %v370 = vld [vmem:[#allocation2 + $0x418] sm:$0xff]
    %v371 = vld [vmem:[#allocation2 + $0x420] sm:$0xff]
    %v372 = vld [vmem:[#allocation2 + $0x428] sm:$0xff]
    %v373 = vld [vmem:[#allocation2 + $0x430] sm:$0xff]
    %v374 = vld [vmem:[#allocation2 + $0x438] sm:$0xff]
    %v375 = vld [vmem:[#allocation2 + $0x440] sm:$0xff]
    %v376 = vld [vmem:[#allocation2 + $0x448] sm:$0xff]
    %v377 = vld [vmem:[#allocation2 + $0x450] sm:$0xff]
    %v378 = vld [vmem:[#allocation2 + $0x458] sm:$0xff]
    %v379 = vld [vmem:[#allocation2 + $0x460] sm:$0xff]
    %v380 = vld [vmem:[#allocation2 + $0x468] sm:$0xff]
    %v381 = vld [vmem:[#allocation2 + $0x470] sm:$0xff]
    %v382 = vld [vmem:[#allocation2 + $0x478] sm:$0xff]
    %v383 = vld [vmem:[#allocation2 + $0x480] sm:$0xff]
    %v384 = vld [vmem:[#allocation2 + $0x488] sm:$0xff]
    %v385 = vld [vmem:[#allocation2 + $0x490] sm:$0xff]
    %v386 = vld [vmem:[#allocation2 + $0x498] sm:$0xff]
    %v387 = vld [vmem:[#allocation2 + $0x4a0] sm:$0xff]
    %v388 = vld [vmem:[#allocation2 + $0x4a8] sm:$0xff]
    %v389 = vld [vmem:[#allocation2 + $0x4b0] sm:$0xff]
    %v390 = vld [vmem:[#allocation2 + $0x4b8] sm:$0xff]
    %v391 = vld [vmem:[#allocation2 + $0x4c0] sm:$0xff]
    %v392 = vld [vmem:[#allocation2 + $0x4c8] sm:$0xff]
    %v393 = vld [vmem:[#allocation2 + $0x4d0] sm:$0xff]
    %v394 = vld [vmem:[#allocation2 + $0x4d8] sm:$0xff]
    %v395 = vld [vmem:[#allocation2 + $0x4e0] sm:$0xff]
    %v396 = vld [vmem:[#allocation2 + $0x4e8] sm:$0xff]
    %v397 = vld [vmem:[#allocation2 + $0x4f0] sm:$0xff]
    %v398 = vld [vmem:[#allocation2 + $0x4f8] sm:$0xff]
    %v399 = vld [vmem:[#allocation2 + $0x500] sm:$0xff]
    %v400 = vld [vmem:[#allocation2 + $0x508] sm:$0xff]
    %v401 = vld [vmem:[#allocation2 + $0x510] sm:$0xff]
    %v402 = vld [vmem:[#allocation2 + $0x518] sm:$0xff]
    %v403 = vld [vmem:[#allocation2 + $0x520] sm:$0xff]
    %v404 = vld [vmem:[#allocation2 + $0x528] sm:$0xff]
    %v405 = vld [vmem:[#allocation2 + $0x530] sm:$0xff]
    %v406 = vld [vmem:[#allocation2 + $0x538] sm:$0xff]
    %v407 = vld [vmem:[#allocation2 + $0x540] sm:$0xff]
    %v408 = vld [vmem:[#allocation2 + $0x548] sm:$0xff]
    %v409 = vld [vmem:[#allocation2 + $0x550] sm:$0xff]
    %v410 = vld [vmem:[#allocation2 + $0x558] sm:$0xff]
    %v411 = vld [vmem:[#allocation2 + $0x560] sm:$0xff]
    %v412 = vld [vmem:[#allocation2 + $0x568] sm:$0xff]
    %v413 = vld [vmem:[#allocation2 + $0x570] sm:$0xff]
    %v414 = vld [vmem:[#allocation2 + $0x578] sm:$0xff]
    %v415 = vld [vmem:[#allocation2 + $0x580] sm:$0xff]
    %v416 = vld [vmem:[#allocation2 + $0x588] sm:$0xff]
    %v417 = vld [vmem:[#allocation2 + $0x590] sm:$0xff]
    %v418 = vld [vmem:[#allocation2 + $0x598] sm:$0xff]
    %v419 = vld [vmem:[#allocation2 + $0x5a0] sm:$0xff]
    %v420 = vld [vmem:[#allocation2 + $0x5a8] sm:$0xff]
    %v421 = vld [vmem:[#allocation2 + $0x5b0] sm:$0xff]
    %v422 = vld [vmem:[#allocation2 + $0x5b8] sm:$0xff]
    %v423 = vld [vmem:[#allocation2 + $0x5c0] sm:$0xff]
    %v424 = vld [vmem:[#allocation2 + $0x5c8] sm:$0xff]
    %v425 = vld [vmem:[#allocation2 + $0x5d0] sm:$0xff]
    %v426 = vld [vmem:[#allocation2 + $0x5d8] sm:$0xff]
    %v427 = vld [vmem:[#allocation2 + $0x5e0] sm:$0xff]
    %v428 = vld [vmem:[#allocation2 + $0x5e8] sm:$0xff]
    %v429 = vld [vmem:[#allocation2 + $0x5f0] sm:$0xff]
    %v430 = vld [vmem:[#allocation2 + $0x5f8] sm:$0xff]
    %v431 = vld [vmem:[#allocation3] sm:$0xff]
    %v432 = vld [vmem:[#allocation3 + $0x8] sm:$0xff]
    %v433 = vld [vmem:[#allocation3 + $0x10] sm:$0xff]
    %v434 = vld [vmem:[#allocation3 + $0x18] sm:$0xff]
    %v435 = vld [vmem:[#allocation3 + $0x20] sm:$0xff]
    %v436 = vld [vmem:[#allocation3 + $0x28] sm:$0xff]
    %v437 = vld [vmem:[#allocation3 + $0x30] sm:$0xff]
    %v438 = vld [vmem:[#allocation3 + $0x38] sm:$0xff]
    %v439 = vld [vmem:[#allocation3 + $0x40] sm:$0xff]
    %v440 = vld [vmem:[#allocation3 + $0x48] sm:$0xff]
    %v441 = vld [vmem:[#allocation3 + $0x50] sm:$0xff]
    %v442 = vld [vmem:[#allocation3 + $0x58] sm:$0xff]
    %v443 = vld [vmem:[#allocation3 + $0x60] sm:$0xff]
    %v444 = vld [vmem:[#allocation3 + $0x68] sm:$0xff]
    %v445 = vld [vmem:[#allocation3 + $0x70] sm:$0xff]
    %v446 = vld [vmem:[#allocation3 + $0x78] sm:$0xff]
    %v447 = vld [vmem:[#allocation3 + $0x80] sm:$0xff]
    %v448 = vld [vmem:[#allocation3 + $0x88] sm:$0xff]
    %v449 = vld [vmem:[#allocation3 + $0x90] sm:$0xff]
    %v450 = vld [vmem:[#allocation3 + $0x98] sm:$0xff]
    %v451 = vld [vmem:[#allocation3 + $0xa0] sm:$0xff]
    %v452 = vld [vmem:[#allocation3 + $0xa8] sm:$0xff]
    %v453 = vld [vmem:[#allocation3 + $0xb0] sm:$0xff]
    %v454 = vld [vmem:[#allocation3 + $0xb8] sm:$0xff]
    %v455 = vld [vmem:[#allocation3 + $0xc0] sm:$0xff]
    %v456 = vld [vmem:[#allocation3 + $0xc8] sm:$0xff]
    %v457 = vld [vmem:[#allocation3 + $0xd0] sm:$0xff]
    %v458 = vld [vmem:[#allocation3 + $0xd8] sm:$0xff]
    %v459 = vld [vmem:[#allocation3 + $0xe0] sm:$0xff]
    %v460 = vld [vmem:[#allocation3 + $0xe8] sm:$0xff]
    %v461 = vld [vmem:[#allocation3 + $0xf0] sm:$0xff]
    %v462 = vld [vmem:[#allocation3 + $0xf8] sm:$0xff]
    %v463 = vld [vmem:[#allocation3 + $0x100] sm:$0xff]
    %v464 = vld [vmem:[#allocation3 + $0x108] sm:$0xff]
    %v465 = vld [vmem:[#allocation3 + $0x110] sm:$0xff]
    %v466 = vld [vmem:[#allocation3 + $0x118] sm:$0xff]
    %v467 = vld [vmem:[#allocation3 + $0x120] sm:$0xff]
    %v468 = vld [vmem:[#allocation3 + $0x128] sm:$0xff]
    %v469 = vld [vmem:[#allocation3 + $0x130] sm:$0xff]
    %v470 = vld [vmem:[#allocation3 + $0x138] sm:$0xff]
    %v471 = vld [vmem:[#allocation3 + $0x140] sm:$0xff]
    %v472 = vld [vmem:[#allocation3 + $0x148] sm:$0xff]
    %v473 = vld [vmem:[#allocation3 + $0x150] sm:$0xff]
    %v474 = vld [vmem:[#allocation3 + $0x158] sm:$0xff]
    %v475 = vld [vmem:[#allocation3 + $0x160] sm:$0xff]
    %v476 = vld [vmem:[#allocation3 + $0x168] sm:$0xff]
    %v477 = vld [vmem:[#allocation3 + $0x170] sm:$0xff]
    %v478 = vld [vmem:[#allocation3 + $0x178] sm:$0xff]
    %v479 = vld [vmem:[#allocation3 + $0x180] sm:$0xff]
    %v480 = vld [vmem:[#allocation3 + $0x188] sm:$0xff]
    %v481 = vld [vmem:[#allocation3 + $0x190] sm:$0xff]
    %v482 = vld [vmem:[#allocation3 + $0x198] sm:$0xff]
    %v483 = vld [vmem:[#allocation3 + $0x1a0] sm:$0xff]
    %v484 = vld [vmem:[#allocation3 + $0x1a8] sm:$0xff]
    %v485 = vld [vmem:[#allocation3 + $0x1b0] sm:$0xff]
    %v486 = vld [vmem:[#allocation3 + $0x1b8] sm:$0xff]
    %v487 = vld [vmem:[#allocation3 + $0x1c0] sm:$0xff]
    %v488 = vld [vmem:[#allocation3 + $0x1c8] sm:$0xff]
    %v489 = vld [vmem:[#allocation3 + $0x1d0] sm:$0xff]
    %v490 = vld [vmem:[#allocation3 + $0x1d8] sm:$0xff]
    %v491 = vld [vmem:[#allocation3 + $0x1e0] sm:$0xff]
    %v492 = vld [vmem:[#allocation3 + $0x1e8] sm:$0xff]
    %v493 = vld [vmem:[#allocation3 + $0x1f0] sm:$0xff]
    %v494 = vld [vmem:[#allocation3 + $0x1f8] sm:$0xff]
    %v495 = vld [vmem:[#allocation6] sm:$0xff]
    %v496 = vld [vmem:[#allocation6 + $0x8] sm:$0xff]
    %v497 = vld [vmem:[#allocation6 + $0x10] sm:$0xff]
    %v498 = vld [vmem:[#allocation6 + $0x18] sm:$0xff]
    %v499 = vld [vmem:[#allocation6 + $0x20] sm:$0xff]
    %v500 = vld [vmem:[#allocation6 + $0x28] sm:$0xff]
    %v501 = vld [vmem:[#allocation6 + $0x30] sm:$0xff]
    %v502 = vld [vmem:[#allocation6 + $0x38] sm:$0xff]
    %v503 = vld [vmem:[#allocation6 + $0x40] sm:$0xff]
    %v504 = vld [vmem:[#allocation6 + $0x48] sm:$0xff]
    %v505 = vld [vmem:[#allocation6 + $0x50] sm:$0xff]
    %v506 = vld [vmem:[#allocation6 + $0x58] sm:$0xff]
    %v507 = vld [vmem:[#allocation6 + $0x60] sm:$0xff]
    %v508 = vld [vmem:[#allocation6 + $0x68] sm:$0xff]
    %v509 = vld [vmem:[#allocation6 + $0x70] sm:$0xff]
    %v510 = vld [vmem:[#allocation6 + $0x78] sm:$0xff]
    %v511 = vld [vmem:[#allocation6 + $0x80] sm:$0xff]
    %v512 = vld [vmem:[#allocation6 + $0x88] sm:$0xff]
    %v513 = vld [vmem:[#allocation6 + $0x90] sm:$0xff]
    %v514 = vld [vmem:[#allocation6 + $0x98] sm:$0xff]
    %v515 = vld [vmem:[#allocation6 + $0xa0] sm:$0xff]
    %v516 = vld [vmem:[#allocation6 + $0xa8] sm:$0xff]
    %v517 = vld [vmem:[#allocation6 + $0xb0] sm:$0xff]
    %v518 = vld [vmem:[#allocation6 + $0xb8] sm:$0xff]
    %v519 = vld [vmem:[#allocation6 + $0xc0] sm:$0xff]
    %v520 = vld [vmem:[#allocation6 + $0xc8] sm:$0xff]
    %v521 = vld [vmem:[#allocation6 + $0xd0] sm:$0xff]
    %v522 = vld [vmem:[#allocation6 + $0xd8] sm:$0xff]
    %v523 = vld [vmem:[#allocation6 + $0xe0] sm:$0xff]
    %v524 = vld [vmem:[#allocation6 + $0xe8] sm:$0xff]
    %v525 = vld [vmem:[#allocation6 + $0xf0] sm:$0xff]
    %v526 = vld [vmem:[#allocation6 + $0xf8] sm:$0xff]
    %v527 = vld [vmem:[#allocation6 + $0x100] sm:$0xff]
    %v528 = vld [vmem:[#allocation6 + $0x108] sm:$0xff]
    %v529 = vld [vmem:[#allocation6 + $0x110] sm:$0xff]
    %v530 = vld [vmem:[#allocation6 + $0x118] sm:$0xff]
    %v531 = vld [vmem:[#allocation6 + $0x120] sm:$0xff]
    %v532 = vld [vmem:[#allocation6 + $0x128] sm:$0xff]
    %v533 = vld [vmem:[#allocation6 + $0x130] sm:$0xff]
    %v534 = vld [vmem:[#allocation6 + $0x138] sm:$0xff]
    %v535 = vld [vmem:[#allocation6 + $0x140] sm:$0xff]
    %v536 = vld [vmem:[#allocation6 + $0x148] sm:$0xff]
    %v537 = vld [vmem:[#allocation6 + $0x150] sm:$0xff]
    %v538 = vld [vmem:[#allocation6 + $0x158] sm:$0xff]
    %v539 = vld [vmem:[#allocation6 + $0x160] sm:$0xff]
    %v540 = vld [vmem:[#allocation6 + $0x168] sm:$0xff]
    %v541 = vld [vmem:[#allocation6 + $0x170] sm:$0xff]
    %v542 = vld [vmem:[#allocation6 + $0x178] sm:$0xff]
    %543 = vmatprep.subr.mxu0 %v541
    %544 = vmatpush1.msra.mxu0 %v540
    %545 = vmatprep.subr.mxu0 %v538
    %546 = vmatpush1.msra.mxu0 %v537
    %547 = vmatprep.subr.mxu0 %v535
    %548 = vmatpush1.msra.mxu0 %v534
    %549 = vmatprep.subr.mxu0 %v532
    %550 = vmatpush1.msra.mxu0 %v531
    %551 = vmatprep.subr.mxu0 %v529
    %552 = vmatpush1.msra.mxu0 %v528
    %553 = vmatprep.subr.mxu0 %v526
    %554 = vmatpush1.msra.mxu0 %v525
    %555 = vmatprep.subr.mxu0 %v523
    %556 = vmatpush1.msra.mxu0 %v522
    %557 = vmatprep.subr.mxu0 %v520
    %558 = vmatpush1.msra.mxu0 %v519
    %559 = vmatprep.subr.mxu0 %v517
    %560 = vmatpush1.msra.mxu0 %v516
    %561 = vmatprep.subr.mxu0 %v514
    %562 = vmatpush1.msra.mxu0 %v513
    %563 = vmatprep.subr.mxu0 %v511
    %564 = vmatpush1.msra.mxu0 %v510
    %565 = vmatprep.subr.mxu0 %v508
    %566 = vmatpush1.msra.mxu0 %v507
    %567 = vmatprep.subr.mxu0 %v505
    %568 = vmatpush1.msra.mxu0 %v504
    %569 = vmatprep.subr.mxu0 %v502
    %570 = vmatpush1.msra.mxu0 %v501
    %571 = vmatprep.subr.mxu0 %v499
    %572 = vmatpush1.msra.mxu0 %v498
    %573 = vmatprep.subr.mxu0 %v496
    %574 = vmatpush1.msra.mxu0 %v495
    %575 = vmatprep.subr.mxu0 0.0
    %576 = vmatpush2.msra.mxu0 0.0
    %577 = vmatprep.subr.mxu0 0.0
    %578 = vmatpush2.msra.mxu0 0.0
    %579 = vmatprep.subr.mxu0 0.0
    %580 = vmatpush2.msra.mxu0 0.0
    %581 = vmatprep.subr.mxu0 0.0
    %582 = vmatpush2.msra.mxu0 0.0
    %583 = vmatprep.subr.mxu0 0.0
    %584 = vmatpush2.msra.mxu0 0.0
    %585 = vmatprep.subr.mxu0 0.0
    %586 = vmatpush2.msra.mxu0 0.0
    %587 = vmatprep.subr.mxu0 0.0
    %588 = vmatpush2.msra.mxu0 0.0
    %589 = vmatprep.subr.mxu0 0.0
    %590 = vmatpush2.msra.mxu0 0.0
    %591 = vmatprep.subr.mxu0 0.0
    %592 = vmatpush2.msra.mxu0 0.0
    %593 = vmatprep.subr.mxu0 0.0
    %594 = vmatpush2.msra.mxu0 0.0
    %595 = vmatprep.subr.mxu0 0.0
    %596 = vmatpush2.msra.mxu0 0.0
    %597 = vmatprep.subr.mxu0 0.0
    %598 = vmatpush2.msra.mxu0 0.0
    %599 = vmatprep.subr.mxu0 0.0
    %600 = vmatpush2.msra.mxu0 0.0
    %601 = vmatprep.subr.mxu0 0.0
    %602 = vmatpush2.msra.mxu0 0.0
    %603 = vmatprep.subr.mxu0 0.0
    %604 = vmatpush2.msra.mxu0 0.0
    %605 = vmatprep.subr.mxu0 0.0
    %606 = vmatpush2.msra.mxu0 0.0
    %607 = vmatprep.mubr.f32.mxu0 0.0
    %608 = vmatmul.mubr.f32.gmra.mxu0 %v431
    %v609 = vpop.f32.mrf.mxu0
    %v610 = vadd.f32 0.0, %v609
    %v611 = vpop.f32.mrf.mxu0
    %v612 = vadd.f32 0.0, %v611
    %613 = vmatprep.mubr.f32.mxu0 0.0
    %614 = vmatmul.mubr.f32.gmra.mxu0 %v432
    %v615 = vpop.f32.mrf.mxu0
    %v616 = vadd.f32 0.0, %v615
    %v617 = vpop.f32.mrf.mxu0
    %v618 = vadd.f32 0.0, %v617
    %619 = vmatprep.mubr.f32.mxu0 0.0
    %620 = vmatmul.mubr.f32.gmra.mxu0 %v433
    %v621 = vpop.f32.mrf.mxu0
    %v622 = vadd.f32 0.0, %v621
    %v623 = vpop.f32.mrf.mxu0
    %v624 = vadd.f32 0.0, %v623
    %625 = vmatprep.mubr.f32.mxu0 0.0
    %626 = vmatmul.mubr.f32.gmra.mxu0 %v434
    %v627 = vpop.f32.mrf.mxu0
    %v628 = vadd.f32 0.0, %v627
    %v629 = vpop.f32.mrf.mxu0
    %v630 = vadd.f32 0.0, %v629
    %631 = vmatprep.mubr.f32.mxu0 0.0
    %632 = vmatmul.mubr.f32.gmra.mxu0 %v435
    %v633 = vpop.f32.mrf.mxu0
    %v634 = vadd.f32 0.0, %v633
    %v635 = vpop.f32.mrf.mxu0
    %v636 = vadd.f32 0.0, %v635
    %637 = vmatprep.mubr.f32.mxu0 0.0
    %638 = vmatmul.mubr.f32.gmra.mxu0 %v436
    %v639 = vpop.f32.mrf.mxu0
    %v640 = vadd.f32 0.0, %v639
    %v641 = vpop.f32.mrf.mxu0
    %v642 = vadd.f32 0.0, %v641
    %643 = vmatprep.mubr.f32.mxu0 0.0
    %644 = vmatmul.mubr.f32.gmra.mxu0 %v437
    %v645 = vpop.f32.mrf.mxu0
    %v646 = vadd.f32 0.0, %v645
    %v647 = vpop.f32.mrf.mxu0
    %v648 = vadd.f32 0.0, %v647
    %649 = vmatprep.mubr.f32.mxu0 0.0
    %650 = vmatmul.mubr.f32.gmra.mxu0 %v438
    %v651 = vpop.f32.mrf.mxu0
    %v652 = vadd.f32 0.0, %v651
    %v653 = vpop.f32.mrf.mxu0
    %v654 = vadd.f32 0.0, %v653
    %655 = vmatprep.mubr.f32.mxu0 0.0
    %656 = vmatmul.mubr.f32.gmra.mxu0 %v439
    %v657 = vpop.f32.mrf.mxu0
    %v658 = vadd.f32 0.0, %v657
    %v659 = vpop.f32.mrf.mxu0
    %v660 = vadd.f32 0.0, %v659
    %661 = vmatprep.mubr.f32.mxu0 0.0
    %662 = vmatmul.mubr.f32.gmra.mxu0 %v440
    %v663 = vpop.f32.mrf.mxu0
    %v664 = vadd.f32 0.0, %v663
    %v665 = vpop.f32.mrf.mxu0
    %v666 = vadd.f32 0.0, %v665
    %667 = vmatprep.mubr.f32.mxu0 0.0
    %668 = vmatmul.mubr.f32.gmra.mxu0 %v441
    %v669 = vpop.f32.mrf.mxu0
    %v670 = vadd.f32 0.0, %v669
    %v671 = vpop.f32.mrf.mxu0
    %v672 = vadd.f32 0.0, %v671
    %673 = vmatprep.mubr.f32.mxu0 0.0
    %674 = vmatmul.mubr.f32.gmra.mxu0 %v442
    %v675 = vpop.f32.mrf.mxu0
    %v676 = vadd.f32 0.0, %v675
    %v677 = vpop.f32.mrf.mxu0
    %v678 = vadd.f32 0.0, %v677
    %679 = vmatprep.mubr.f32.mxu0 0.0
    %680 = vmatmul.mubr.f32.gmra.mxu0 %v443
    %v681 = vpop.f32.mrf.mxu0
    %v682 = vadd.f32 0.0, %v681
    %v683 = vpop.f32.mrf.mxu0
    %v684 = vadd.f32 0.0, %v683
    %685 = vmatprep.mubr.f32.mxu0 0.0
    %686 = vmatmul.mubr.f32.gmra.mxu0 %v444
    %v687 = vpop.f32.mrf.mxu0
    %v688 = vadd.f32 0.0, %v687
    %v689 = vpop.f32.mrf.mxu0
    %v690 = vadd.f32 0.0, %v689
    %691 = vmatprep.mubr.f32.mxu0 0.0
    %692 = vmatmul.mubr.f32.gmra.mxu0 %v445
    %v693 = vpop.f32.mrf.mxu0
    %v694 = vadd.f32 0.0, %v693
    %v695 = vpop.f32.mrf.mxu0
    %v696 = vadd.f32 0.0, %v695
    %697 = vmatprep.mubr.f32.mxu0 0.0
    %698 = vmatmul.mubr.f32.gmra.mxu0 %v446
    %v699 = vpop.f32.mrf.mxu0
    %v700 = vadd.f32 0.0, %v699
    %v701 = vpop.f32.mrf.mxu0
    %v702 = vadd.f32 0.0, %v701
    %703 = vmatprep.mubr.f32.mxu0 0.0
    %704 = vmatmul.mubr.f32.gmra.mxu0 %v447
    %v705 = vpop.f32.mrf.mxu0
    %v706 = vadd.f32 0.0, %v705
    %v707 = vpop.f32.mrf.mxu0
    %v708 = vadd.f32 0.0, %v707
    %709 = vmatprep.mubr.f32.mxu0 0.0
    %710 = vmatmul.mubr.f32.gmra.mxu0 %v448
    %v711 = vpop.f32.mrf.mxu0
    %v712 = vadd.f32 0.0, %v711
    %v713 = vpop.f32.mrf.mxu0
    %v714 = vadd.f32 0.0, %v713
    %715 = vmatprep.mubr.f32.mxu0 0.0
    %716 = vmatmul.mubr.f32.gmra.mxu0 %v449
    %v717 = vpop.f32.mrf.mxu0
    %v718 = vadd.f32 0.0, %v717
    %v719 = vpop.f32.mrf.mxu0
    %v720 = vadd.f32 0.0, %v719
    %721 = vmatprep.mubr.f32.mxu0 0.0
    %722 = vmatmul.mubr.f32.gmra.mxu0 %v450
    %v723 = vpop.f32.mrf.mxu0
    %v724 = vadd.f32 0.0, %v723
    %v725 = vpop.f32.mrf.mxu0
    %v726 = vadd.f32 0.0, %v725
    %727 = vmatprep.mubr.f32.mxu0 0.0
    %728 = vmatmul.mubr.f32.gmra.mxu0 %v451
    %v729 = vpop.f32.mrf.mxu0
    %v730 = vadd.f32 0.0, %v729
    %v731 = vpop.f32.mrf.mxu0
    %v732 = vadd.f32 0.0, %v731
    %733 = vmatprep.mubr.f32.mxu0 0.0
    %734 = vmatmul.mubr.f32.gmra.mxu0 %v452
    %v735 = vpop.f32.mrf.mxu0
    %v736 = vadd.f32 0.0, %v735
    %v737 = vpop.f32.mrf.mxu0
    %v738 = vadd.f32 0.0, %v737
    %739 = vmatprep.mubr.f32.mxu0 0.0
    %740 = vmatmul.mubr.f32.gmra.mxu0 %v453
    %v741 = vpop.f32.mrf.mxu0
    %v742 = vadd.f32 0.0, %v741
    %v743 = vpop.f32.mrf.mxu0
    %v744 = vadd.f32 0.0, %v743
    %745 = vmatprep.mubr.f32.mxu0 0.0
    %746 = vmatmul.mubr.f32.gmra.mxu0 %v454
    %v747 = vpop.f32.mrf.mxu0
    %v748 = vadd.f32 0.0, %v747
    %v749 = vpop.f32.mrf.mxu0
    %v750 = vadd.f32 0.0, %v749
    %751 = vmatprep.mubr.f32.mxu0 0.0
    %752 = vmatmul.mubr.f32.gmra.mxu0 %v455
    %v753 = vpop.f32.mrf.mxu0
    %v754 = vadd.f32 0.0, %v753
    %v755 = vpop.f32.mrf.mxu0
    %v756 = vadd.f32 0.0, %v755
    %757 = vmatprep.mubr.f32.mxu0 0.0
    %758 = vmatmul.mubr.f32.gmra.mxu0 %v456
    %v759 = vpop.f32.mrf.mxu0
    %v760 = vadd.f32 0.0, %v759
    %v761 = vpop.f32.mrf.mxu0
    %v762 = vadd.f32 0.0, %v761
    %763 = vmatprep.mubr.f32.mxu0 0.0
    %764 = vmatmul.mubr.f32.gmra.mxu0 %v457
    %v765 = vpop.f32.mrf.mxu0
    %v766 = vadd.f32 0.0, %v765
    %v767 = vpop.f32.mrf.mxu0
    %v768 = vadd.f32 0.0, %v767
    %769 = vmatprep.mubr.f32.mxu0 0.0
    %770 = vmatmul.mubr.f32.gmra.mxu0 %v458
    %v771 = vpop.f32.mrf.mxu0
    %v772 = vadd.f32 0.0, %v771
    %v773 = vpop.f32.mrf.mxu0
    %v774 = vadd.f32 0.0, %v773
    %775 = vmatprep.mubr.f32.mxu0 0.0
    %776 = vmatmul.mubr.f32.gmra.mxu0 %v459
    %v777 = vpop.f32.mrf.mxu0
    %v778 = vadd.f32 0.0, %v777
    %v779 = vpop.f32.mrf.mxu0
    %v780 = vadd.f32 0.0, %v779
    %781 = vmatprep.mubr.f32.mxu0 0.0
    %782 = vmatmul.mubr.f32.gmra.mxu0 %v460
    %v783 = vpop.f32.mrf.mxu0
    %v784 = vadd.f32 0.0, %v783
    %v785 = vpop.f32.mrf.mxu0
    %v786 = vadd.f32 0.0, %v785
    %787 = vmatprep.mubr.f32.mxu0 0.0
    %788 = vmatmul.mubr.f32.gmra.mxu0 %v461
    %v789 = vpop.f32.mrf.mxu0
    %v790 = vadd.f32 0.0, %v789
    %v791 = vpop.f32.mrf.mxu0
    %v792 = vadd.f32 0.0, %v791
    %793 = vmatprep.mubr.f32.mxu0 0.0
    %794 = vmatmul.mubr.f32.gmra.mxu0 %v462
    %v795 = vpop.f32.mrf.mxu0
    %v796 = vadd.f32 0.0, %v795
    %v797 = vpop.f32.mrf.mxu0
    %v798 = vadd.f32 0.0, %v797
    %799 = vmatprep.mubr.f32.mxu0 0.0
    %800 = vmatmul.mubr.f32.gmra.mxu0 %v463
    %v801 = vpop.f32.mrf.mxu0
    %v802 = vadd.f32 0.0, %v801
    %v803 = vpop.f32.mrf.mxu0
    %v804 = vadd.f32 0.0, %v803
    %805 = vmatprep.mubr.f32.mxu0 0.0
    %806 = vmatmul.mubr.f32.gmra.mxu0 %v464
    %v807 = vpop.f32.mrf.mxu0
    %v808 = vadd.f32 0.0, %v807
    %v809 = vpop.f32.mrf.mxu0
    %v810 = vadd.f32 0.0, %v809
    %811 = vmatprep.mubr.f32.mxu0 0.0
    %812 = vmatmul.mubr.f32.gmra.mxu0 %v465
    %v813 = vpop.f32.mrf.mxu0
    %v814 = vadd.f32 0.0, %v813
    %v815 = vpop.f32.mrf.mxu0
    %v816 = vadd.f32 0.0, %v815
    %817 = vmatprep.mubr.f32.mxu0 0.0
    %818 = vmatmul.mubr.f32.gmra.mxu0 %v466
    %v819 = vpop.f32.mrf.mxu0
    %v820 = vadd.f32 0.0, %v819
    %v821 = vpop.f32.mrf.mxu0
    %v822 = vadd.f32 0.0, %v821
    %823 = vmatprep.mubr.f32.mxu0 0.0
    %824 = vmatmul.mubr.f32.gmra.mxu0 %v467
    %v825 = vpop.f32.mrf.mxu0
    %v826 = vadd.f32 0.0, %v825
    %v827 = vpop.f32.mrf.mxu0
    %v828 = vadd.f32 0.0, %v827
    %829 = vmatprep.mubr.f32.mxu0 0.0
    %830 = vmatmul.mubr.f32.gmra.mxu0 %v468
    %v831 = vpop.f32.mrf.mxu0
    %v832 = vadd.f32 0.0, %v831
    %v833 = vpop.f32.mrf.mxu0
    %v834 = vadd.f32 0.0, %v833
    %835 = vmatprep.mubr.f32.mxu0 0.0
    %836 = vmatmul.mubr.f32.gmra.mxu0 %v469
    %v837 = vpop.f32.mrf.mxu0
    %v838 = vadd.f32 0.0, %v837
    %v839 = vpop.f32.mrf.mxu0
    %v840 = vadd.f32 0.0, %v839
    %841 = vmatprep.mubr.f32.mxu0 0.0
    %842 = vmatmul.mubr.f32.gmra.mxu0 %v470
    %v843 = vpop.f32.mrf.mxu0
    %v844 = vadd.f32 0.0, %v843
    %v845 = vpop.f32.mrf.mxu0
    %v846 = vadd.f32 0.0, %v845
    %847 = vmatprep.mubr.f32.mxu0 0.0
    %848 = vmatmul.mubr.f32.gmra.mxu0 %v471
    %v849 = vpop.f32.mrf.mxu0
    %v850 = vadd.f32 0.0, %v849
    %v851 = vpop.f32.mrf.mxu0
    %v852 = vadd.f32 0.0, %v851
    %853 = vmatprep.mubr.f32.mxu0 0.0
    %854 = vmatmul.mubr.f32.gmra.mxu0 %v472
    %v855 = vpop.f32.mrf.mxu0
    %v856 = vadd.f32 0.0, %v855
    %v857 = vpop.f32.mrf.mxu0
    %v858 = vadd.f32 0.0, %v857
    %859 = vmatprep.mubr.f32.mxu0 0.0
    %860 = vmatmul.mubr.f32.gmra.mxu0 %v473
    %v861 = vpop.f32.mrf.mxu0
    %v862 = vadd.f32 0.0, %v861
    %v863 = vpop.f32.mrf.mxu0
    %v864 = vadd.f32 0.0, %v863
    %865 = vmatprep.mubr.f32.mxu0 0.0
    %866 = vmatmul.mubr.f32.gmra.mxu0 %v474
    %v867 = vpop.f32.mrf.mxu0
    %v868 = vadd.f32 0.0, %v867
    %v869 = vpop.f32.mrf.mxu0
    %v870 = vadd.f32 0.0, %v869
    %871 = vmatprep.mubr.f32.mxu0 0.0
    %872 = vmatmul.mubr.f32.gmra.mxu0 %v475
    %v873 = vpop.f32.mrf.mxu0
    %v874 = vadd.f32 0.0, %v873
    %v875 = vpop.f32.mrf.mxu0
    %v876 = vadd.f32 0.0, %v875
    %877 = vmatprep.mubr.f32.mxu0 0.0
    %878 = vmatmul.mubr.f32.gmra.mxu0 %v476
    %v879 = vpop.f32.mrf.mxu0
    %v880 = vadd.f32 0.0, %v879
    %v881 = vpop.f32.mrf.mxu0
    %v882 = vadd.f32 0.0, %v881
    %883 = vmatprep.mubr.f32.mxu0 0.0
    %884 = vmatmul.mubr.f32.gmra.mxu0 %v477
    %v885 = vpop.f32.mrf.mxu0
    %v886 = vadd.f32 0.0, %v885
    %v887 = vpop.f32.mrf.mxu0
    %v888 = vadd.f32 0.0, %v887
    %889 = vmatprep.mubr.f32.mxu0 0.0
    %890 = vmatmul.mubr.f32.gmra.mxu0 %v478
    %v891 = vpop.f32.mrf.mxu0
    %v892 = vadd.f32 0.0, %v891
    %v893 = vpop.f32.mrf.mxu0
    %v894 = vadd.f32 0.0, %v893
    %895 = vmatprep.mubr.f32.mxu0 0.0
    %896 = vmatmul.mubr.f32.gmra.mxu0 %v479
    %v897 = vpop.f32.mrf.mxu0
    %v898 = vadd.f32 0.0, %v897
    %v899 = vpop.f32.mrf.mxu0
    %v900 = vadd.f32 0.0, %v899
    %901 = vmatprep.mubr.f32.mxu0 0.0
    %902 = vmatmul.mubr.f32.gmra.mxu0 %v480
    %v903 = vpop.f32.mrf.mxu0
    %v904 = vadd.f32 0.0, %v903
    %v905 = vpop.f32.mrf.mxu0
    %v906 = vadd.f32 0.0, %v905
    %907 = vmatprep.mubr.f32.mxu0 0.0
    %908 = vmatmul.mubr.f32.gmra.mxu0 %v481
    %v909 = vpop.f32.mrf.mxu0
    %v910 = vadd.f32 0.0, %v909
    %v911 = vpop.f32.mrf.mxu0
    %v912 = vadd.f32 0.0, %v911
    %913 = vmatprep.mubr.f32.mxu0 0.0
    %914 = vmatmul.mubr.f32.gmra.mxu0 %v482
    %v915 = vpop.f32.mrf.mxu0
    %v916 = vadd.f32 0.0, %v915
    %v917 = vpop.f32.mrf.mxu0
    %v918 = vadd.f32 0.0, %v917
    %919 = vmatprep.mubr.f32.mxu0 0.0
    %920 = vmatmul.mubr.f32.gmra.mxu0 %v483
    %v921 = vpop.f32.mrf.mxu0
    %v922 = vadd.f32 0.0, %v921
    %v923 = vpop.f32.mrf.mxu0
    %v924 = vadd.f32 0.0, %v923
    %925 = vmatprep.mubr.f32.mxu0 0.0
    %926 = vmatmul.mubr.f32.gmra.mxu0 %v484
    %v927 = vpop.f32.mrf.mxu0
    %v928 = vadd.f32 0.0, %v927
    %v929 = vpop.f32.mrf.mxu0
    %v930 = vadd.f32 0.0, %v929
    %931 = vmatprep.mubr.f32.mxu0 0.0
    %932 = vmatmul.mubr.f32.gmra.mxu0 %v485
    %v933 = vpop.f32.mrf.mxu0
    %v934 = vadd.f32 0.0, %v933
    %v935 = vpop.f32.mrf.mxu0
    %v936 = vadd.f32 0.0, %v935
    %937 = vmatprep.mubr.f32.mxu0 0.0
    %938 = vmatmul.mubr.f32.gmra.mxu0 %v486
    %v939 = vpop.f32.mrf.mxu0
    %v940 = vadd.f32 0.0, %v939
    %v941 = vpop.f32.mrf.mxu0
    %v942 = vadd.f32 0.0, %v941
    %943 = vmatprep.mubr.f32.mxu0 0.0
    %944 = vmatmul.mubr.f32.gmra.mxu0 %v487
    %v945 = vpop.f32.mrf.mxu0
    %v946 = vadd.f32 0.0, %v945
    %v947 = vpop.f32.mrf.mxu0
    %v948 = vadd.f32 0.0, %v947
    %949 = vmatprep.mubr.f32.mxu0 0.0
    %950 = vmatmul.mubr.f32.gmra.mxu0 %v488
    %v951 = vpop.f32.mrf.mxu0
    %v952 = vadd.f32 0.0, %v951
    %v953 = vpop.f32.mrf.mxu0
    %v954 = vadd.f32 0.0, %v953
    %955 = vmatprep.mubr.f32.mxu0 0.0
    %956 = vmatmul.mubr.f32.gmra.mxu0 %v489
    %v957 = vpop.f32.mrf.mxu0
    %v958 = vadd.f32 0.0, %v957
    %v959 = vpop.f32.mrf.mxu0
    %v960 = vadd.f32 0.0, %v959
    %961 = vmatprep.mubr.f32.mxu0 0.0
    %962 = vmatmul.mubr.f32.gmra.mxu0 %v490
    %v963 = vpop.f32.mrf.mxu0
    %v964 = vadd.f32 0.0, %v963
    %v965 = vpop.f32.mrf.mxu0
    %v966 = vadd.f32 0.0, %v965
    %967 = vmatprep.mubr.f32.mxu0 0.0
    %968 = vmatmul.mubr.f32.gmra.mxu0 %v491
    %v969 = vpop.f32.mrf.mxu0
    %v970 = vadd.f32 0.0, %v969
    %v971 = vpop.f32.mrf.mxu0
    %v972 = vadd.f32 0.0, %v971
    %973 = vmatprep.mubr.f32.mxu0 0.0
    %974 = vmatmul.mubr.f32.gmra.mxu0 %v492
    %v975 = vpop.f32.mrf.mxu0
    %v976 = vadd.f32 0.0, %v975
    %v977 = vpop.f32.mrf.mxu0
    %v978 = vadd.f32 0.0, %v977
    %979 = vmatprep.mubr.f32.mxu0 0.0
    %980 = vmatmul.mubr.f32.gmra.mxu0 %v493
    %v981 = vpop.f32.mrf.mxu0
    %v982 = vadd.f32 0.0, %v981
    %v983 = vpop.f32.mrf.mxu0
    %v984 = vadd.f32 0.0, %v983
    %985 = vmatprep.mubr.f32.mxu0 0.0
    %986 = vmatmul.mubr.f32.gmra.mxu0 %v494
    %v987 = vpop.f32.mrf.mxu0
    %v988 = vadd.f32 0.0, %v987
    %v989 = vpop.f32.mrf.mxu0
    %v990 = vadd.f32 0.0, %v989
    %991 = vdwg.mxu0
    %992 = vmatprep.subr.mxu0 0.0
    %993 = vmatpush1.msra.mxu0 %v542
    %994 = vmatprep.subr.mxu0 0.0
    %995 = vmatpush1.msra.mxu0 %v539
    %996 = vmatprep.subr.mxu0 0.0
    %997 = vmatpush1.msra.mxu0 %v536
    %998 = vmatprep.subr.mxu0 0.0
    %999 = vmatpush1.msra.mxu0 %v533
    %1000 = vmatprep.subr.mxu0 0.0
    %1001 = vmatpush1.msra.mxu0 %v530
    %1002 = vmatprep.subr.mxu0 0.0
    %1003 = vmatpush1.msra.mxu0 %v527
    %1004 = vmatprep.subr.mxu0 0.0
    %1005 = vmatpush1.msra.mxu0 %v524
    %1006 = vmatprep.subr.mxu0 0.0
    %1007 = vmatpush1.msra.mxu0 %v521
    %1008 = vmatprep.subr.mxu0 0.0
    %1009 = vmatpush1.msra.mxu0 %v518
    %1010 = vmatprep.subr.mxu0 0.0
    %1011 = vmatpush1.msra.mxu0 %v515
    %1012 = vmatprep.subr.mxu0 0.0
    %1013 = vmatpush1.msra.mxu0 %v512
    %1014 = vmatprep.subr.mxu0 0.0
    %1015 = vmatpush1.msra.mxu0 %v509
    %1016 = vmatprep.subr.mxu0 0.0
    %1017 = vmatpush1.msra.mxu0 %v506
    %1018 = vmatprep.subr.mxu0 0.0
    %1019 = vmatpush1.msra.mxu0 %v503
    %1020 = vmatprep.subr.mxu0 0.0
    %1021 = vmatpush1.msra.mxu0 %v500
    %1022 = vmatprep.subr.mxu0 0.0
    %1023 = vmatpush1.msra.mxu0 %v497
    %1024 = vmatprep.subr.mxu0 0.0
    %1025 = vmatpush2.msra.mxu0 0.0
    %1026 = vmatprep.subr.mxu0 0.0
    %1027 = vmatpush2.msra.mxu0 0.0
    %1028 = vmatprep.subr.mxu0 0.0
    %1029 = vmatpush2.msra.mxu0 0.0
    %1030 = vmatprep.subr.mxu0 0.0
    %1031 = vmatpush2.msra.mxu0 0.0
    %1032 = vmatprep.subr.mxu0 0.0
    %1033 = vmatpush2.msra.mxu0 0.0
    %1034 = vmatprep.subr.mxu0 0.0
    %1035 = vmatpush2.msra.mxu0 0.0
    %1036 = vmatprep.subr.mxu0 0.0
    %1037 = vmatpush2.msra.mxu0 0.0
    %1038 = vmatprep.subr.mxu0 0.0
    %1039 = vmatpush2.msra.mxu0 0.0
    %1040 = vmatprep.subr.mxu0 0.0
    %1041 = vmatpush2.msra.mxu0 0.0
    %1042 = vmatprep.subr.mxu0 0.0
    %1043 = vmatpush2.msra.mxu0 0.0
    %1044 = vmatprep.subr.mxu0 0.0
    %1045 = vmatpush2.msra.mxu0 0.0
    %1046 = vmatprep.subr.mxu0 0.0
    %1047 = vmatpush2.msra.mxu0 0.0
    %1048 = vmatprep.subr.mxu0 0.0
    %1049 = vmatpush2.msra.mxu0 0.0
    %1050 = vmatprep.subr.mxu0 0.0
    %1051 = vmatpush2.msra.mxu0 0.0
    %1052 = vmatprep.subr.mxu0 0.0
    %1053 = vmatpush2.msra.mxu0 0.0
    %1054 = vmatprep.subr.mxu0 0.0
    %1055 = vmatpush2.msra.mxu0 0.0
    %1056 = vmatprep.mubr.f32.mxu0 0.0
    %1057 = vmatmul.mubr.f32.gmra.mxu0 %v431
    %v1058 = vpop.f32.mrf.mxu0
    %v1059 = vadd.f32 0.0, %v1058
    %v1060 = vpop.f32.mrf.mxu0
    %1061 = vmatprep.mubr.f32.mxu0 0.0
    %1062 = vmatmul.mubr.f32.gmra.mxu0 %v432
    %v1063 = vpop.f32.mrf.mxu0
    %v1064 = vadd.f32 0.0, %v1063
    %v1065 = vpop.f32.mrf.mxu0
    %1066 = vmatprep.mubr.f32.mxu0 0.0
    %1067 = vmatmul.mubr.f32.gmra.mxu0 %v433
    %v1068 = vpop.f32.mrf.mxu0
    %v1069 = vadd.f32 0.0, %v1068
    %v1070 = vpop.f32.mrf.mxu0
    %1071 = vmatprep.mubr.f32.mxu0 0.0
    %1072 = vmatmul.mubr.f32.gmra.mxu0 %v434
    %v1073 = vpop.f32.mrf.mxu0
    %v1074 = vadd.f32 0.0, %v1073
    %v1075 = vpop.f32.mrf.mxu0
    %1076 = vmatprep.mubr.f32.mxu0 0.0
    %1077 = vmatmul.mubr.f32.gmra.mxu0 %v435
    %v1078 = vpop.f32.mrf.mxu0
    %v1079 = vadd.f32 0.0, %v1078
    %v1080 = vpop.f32.mrf.mxu0
    %1081 = vmatprep.mubr.f32.mxu0 0.0
    %1082 = vmatmul.mubr.f32.gmra.mxu0 %v436
    %v1083 = vpop.f32.mrf.mxu0
    %v1084 = vadd.f32 0.0, %v1083
    %v1085 = vpop.f32.mrf.mxu0
    %1086 = vmatprep.mubr.f32.mxu0 0.0
    %1087 = vmatmul.mubr.f32.gmra.mxu0 %v437
    %v1088 = vpop.f32.mrf.mxu0
    %v1089 = vadd.f32 0.0, %v1088
    %v1090 = vpop.f32.mrf.mxu0
    %1091 = vmatprep.mubr.f32.mxu0 0.0
    %1092 = vmatmul.mubr.f32.gmra.mxu0 %v438
    %v1093 = vpop.f32.mrf.mxu0
    %v1094 = vadd.f32 0.0, %v1093
    %v1095 = vpop.f32.mrf.mxu0
    %1096 = vmatprep.mubr.f32.mxu0 0.0
    %1097 = vmatmul.mubr.f32.gmra.mxu0 %v439
    %v1098 = vpop.f32.mrf.mxu0
    %v1099 = vadd.f32 0.0, %v1098
    %v1100 = vpop.f32.mrf.mxu0
    %1101 = vmatprep.mubr.f32.mxu0 0.0
    %1102 = vmatmul.mubr.f32.gmra.mxu0 %v440
    %v1103 = vpop.f32.mrf.mxu0
    %v1104 = vadd.f32 0.0, %v1103
    %v1105 = vpop.f32.mrf.mxu0
    %1106 = vmatprep.mubr.f32.mxu0 0.0
    %1107 = vmatmul.mubr.f32.gmra.mxu0 %v441
    %v1108 = vpop.f32.mrf.mxu0
    %v1109 = vadd.f32 0.0, %v1108
    %v1110 = vpop.f32.mrf.mxu0
    %1111 = vmatprep.mubr.f32.mxu0 0.0
    %1112 = vmatmul.mubr.f32.gmra.mxu0 %v442
    %v1113 = vpop.f32.mrf.mxu0
    %v1114 = vadd.f32 0.0, %v1113
    %v1115 = vpop.f32.mrf.mxu0
    %1116 = vmatprep.mubr.f32.mxu0 0.0
    %1117 = vmatmul.mubr.f32.gmra.mxu0 %v443
    %v1118 = vpop.f32.mrf.mxu0
    %v1119 = vadd.f32 0.0, %v1118
    %v1120 = vpop.f32.mrf.mxu0
    %1121 = vmatprep.mubr.f32.mxu0 0.0
    %1122 = vmatmul.mubr.f32.gmra.mxu0 %v444
    %v1123 = vpop.f32.mrf.mxu0
    %v1124 = vadd.f32 0.0, %v1123
    %v1125 = vpop.f32.mrf.mxu0
    %1126 = vmatprep.mubr.f32.mxu0 0.0
    %1127 = vmatmul.mubr.f32.gmra.mxu0 %v445
    %v1128 = vpop.f32.mrf.mxu0
    %v1129 = vadd.f32 0.0, %v1128
    %v1130 = vpop.f32.mrf.mxu0
    %1131 = vmatprep.mubr.f32.mxu0 0.0
    %1132 = vmatmul.mubr.f32.gmra.mxu0 %v446
    %v1133 = vpop.f32.mrf.mxu0
    %v1134 = vadd.f32 0.0, %v1133
    %v1135 = vpop.f32.mrf.mxu0
    %1136 = vmatprep.mubr.f32.mxu0 0.0
    %1137 = vmatmul.mubr.f32.gmra.mxu0 %v447
    %v1138 = vpop.f32.mrf.mxu0
    %v1139 = vadd.f32 0.0, %v1138
    %v1140 = vpop.f32.mrf.mxu0
    %1141 = vmatprep.mubr.f32.mxu0 0.0
    %1142 = vmatmul.mubr.f32.gmra.mxu0 %v448
    %v1143 = vpop.f32.mrf.mxu0
    %v1144 = vadd.f32 0.0, %v1143
    %v1145 = vpop.f32.mrf.mxu0
    %1146 = vmatprep.mubr.f32.mxu0 0.0
    %1147 = vmatmul.mubr.f32.gmra.mxu0 %v449
    %v1148 = vpop.f32.mrf.mxu0
    %v1149 = vadd.f32 0.0, %v1148
    %v1150 = vpop.f32.mrf.mxu0
    %1151 = vmatprep.mubr.f32.mxu0 0.0
    %1152 = vmatmul.mubr.f32.gmra.mxu0 %v450
    %v1153 = vpop.f32.mrf.mxu0
    %v1154 = vadd.f32 0.0, %v1153
    %v1155 = vpop.f32.mrf.mxu0
    %1156 = vmatprep.mubr.f32.mxu0 0.0
    %1157 = vmatmul.mubr.f32.gmra.mxu0 %v451
    %v1158 = vpop.f32.mrf.mxu0
    %v1159 = vadd.f32 0.0, %v1158
    %v1160 = vpop.f32.mrf.mxu0
    %1161 = vmatprep.mubr.f32.mxu0 0.0
    %1162 = vmatmul.mubr.f32.gmra.mxu0 %v452
    %v1163 = vpop.f32.mrf.mxu0
    %v1164 = vadd.f32 0.0, %v1163
    %v1165 = vpop.f32.mrf.mxu0
    %1166 = vmatprep.mubr.f32.mxu0 0.0
    %1167 = vmatmul.mubr.f32.gmra.mxu0 %v453
    %v1168 = vpop.f32.mrf.mxu0
    %v1169 = vadd.f32 0.0, %v1168
    %v1170 = vpop.f32.mrf.mxu0
    %1171 = vmatprep.mubr.f32.mxu0 0.0
    %1172 = vmatmul.mubr.f32.gmra.mxu0 %v454
    %v1173 = vpop.f32.mrf.mxu0
    %v1174 = vadd.f32 0.0, %v1173
    %v1175 = vpop.f32.mrf.mxu0
    %1176 = vmatprep.mubr.f32.mxu0 0.0
    %1177 = vmatmul.mubr.f32.gmra.mxu0 %v455
    %v1178 = vpop.f32.mrf.mxu0
    %v1179 = vadd.f32 0.0, %v1178
    %v1180 = vpop.f32.mrf.mxu0
    %1181 = vmatprep.mubr.f32.mxu0 0.0
    %1182 = vmatmul.mubr.f32.gmra.mxu0 %v456
    %v1183 = vpop.f32.mrf.mxu0
    %v1184 = vadd.f32 0.0, %v1183
    %v1185 = vpop.f32.mrf.mxu0
    %1186 = vmatprep.mubr.f32.mxu0 0.0
    %1187 = vmatmul.mubr.f32.gmra.mxu0 %v457
    %v1188 = vpop.f32.mrf.mxu0
    %v1189 = vadd.f32 0.0, %v1188
    %v1190 = vpop.f32.mrf.mxu0
    %1191 = vmatprep.mubr.f32.mxu0 0.0
    %1192 = vmatmul.mubr.f32.gmra.mxu0 %v458
    %v1193 = vpop.f32.mrf.mxu0
    %v1194 = vadd.f32 0.0, %v1193
    %v1195 = vpop.f32.mrf.mxu0
    %1196 = vmatprep.mubr.f32.mxu0 0.0
    %1197 = vmatmul.mubr.f32.gmra.mxu0 %v459
    %v1198 = vpop.f32.mrf.mxu0
    %v1199 = vadd.f32 0.0, %v1198
    %v1200 = vpop.f32.mrf.mxu0
    %1201 = vmatprep.mubr.f32.mxu0 0.0
    %1202 = vmatmul.mubr.f32.gmra.mxu0 %v460
    %v1203 = vpop.f32.mrf.mxu0
    %v1204 = vadd.f32 0.0, %v1203
    %v1205 = vpop.f32.mrf.mxu0
    %1206 = vmatprep.mubr.f32.mxu0 0.0
    %1207 = vmatmul.mubr.f32.gmra.mxu0 %v461
    %v1208 = vpop.f32.mrf.mxu0
    %v1209 = vadd.f32 0.0, %v1208
    %v1210 = vpop.f32.mrf.mxu0
    %1211 = vmatprep.mubr.f32.mxu0 0.0
    %1212 = vmatmul.mubr.f32.gmra.mxu0 %v462
    %v1213 = vpop.f32.mrf.mxu0
    %v1214 = vadd.f32 0.0, %v1213
    %v1215 = vpop.f32.mrf.mxu0
    %1216 = vmatprep.mubr.f32.mxu0 0.0
    %1217 = vmatmul.mubr.f32.gmra.mxu0 %v463
    %v1218 = vpop.f32.mrf.mxu0
    %v1219 = vadd.f32 0.0, %v1218
    %v1220 = vpop.f32.mrf.mxu0
    %1221 = vmatprep.mubr.f32.mxu0 0.0
    %1222 = vmatmul.mubr.f32.gmra.mxu0 %v464
    %v1223 = vpop.f32.mrf.mxu0
    %v1224 = vadd.f32 0.0, %v1223
    %v1225 = vpop.f32.mrf.mxu0
    %1226 = vmatprep.mubr.f32.mxu0 0.0
    %1227 = vmatmul.mubr.f32.gmra.mxu0 %v465
    %v1228 = vpop.f32.mrf.mxu0
    %v1229 = vadd.f32 0.0, %v1228
    %v1230 = vpop.f32.mrf.mxu0
    %1231 = vmatprep.mubr.f32.mxu0 0.0
    %1232 = vmatmul.mubr.f32.gmra.mxu0 %v466
    %v1233 = vpop.f32.mrf.mxu0
    %v1234 = vadd.f32 0.0, %v1233
    %v1235 = vpop.f32.mrf.mxu0
    %1236 = vmatprep.mubr.f32.mxu0 0.0
    %1237 = vmatmul.mubr.f32.gmra.mxu0 %v467
    %v1238 = vpop.f32.mrf.mxu0
    %v1239 = vadd.f32 0.0, %v1238
    %v1240 = vpop.f32.mrf.mxu0
    %1241 = vmatprep.mubr.f32.mxu0 0.0
    %1242 = vmatmul.mubr.f32.gmra.mxu0 %v468
    %v1243 = vpop.f32.mrf.mxu0
    %v1244 = vadd.f32 0.0, %v1243
    %v1245 = vpop.f32.mrf.mxu0
    %1246 = vmatprep.mubr.f32.mxu0 0.0
    %1247 = vmatmul.mubr.f32.gmra.mxu0 %v469
    %v1248 = vpop.f32.mrf.mxu0
    %v1249 = vadd.f32 0.0, %v1248
    %v1250 = vpop.f32.mrf.mxu0
    %1251 = vmatprep.mubr.f32.mxu0 0.0
    %1252 = vmatmul.mubr.f32.gmra.mxu0 %v470
    %v1253 = vpop.f32.mrf.mxu0
    %v1254 = vadd.f32 0.0, %v1253
    %v1255 = vpop.f32.mrf.mxu0
    %1256 = vmatprep.mubr.f32.mxu0 0.0
    %1257 = vmatmul.mubr.f32.gmra.mxu0 %v471
    %v1258 = vpop.f32.mrf.mxu0
    %v1259 = vadd.f32 0.0, %v1258
    %v1260 = vpop.f32.mrf.mxu0
    %1261 = vmatprep.mubr.f32.mxu0 0.0
    %1262 = vmatmul.mubr.f32.gmra.mxu0 %v472
    %v1263 = vpop.f32.mrf.mxu0
    %v1264 = vadd.f32 0.0, %v1263
    %v1265 = vpop.f32.mrf.mxu0
    %1266 = vmatprep.mubr.f32.mxu0 0.0
    %1267 = vmatmul.mubr.f32.gmra.mxu0 %v473
    %v1268 = vpop.f32.mrf.mxu0
    %v1269 = vadd.f32 0.0, %v1268
    %v1270 = vpop.f32.mrf.mxu0
    %1271 = vmatprep.mubr.f32.mxu0 0.0
    %1272 = vmatmul.mubr.f32.gmra.mxu0 %v474
    %v1273 = vpop.f32.mrf.mxu0
    %v1274 = vadd.f32 0.0, %v1273
    %v1275 = vpop.f32.mrf.mxu0
    %1276 = vmatprep.mubr.f32.mxu0 0.0
    %1277 = vmatmul.mubr.f32.gmra.mxu0 %v475
    %v1278 = vpop.f32.mrf.mxu0
    %v1279 = vadd.f32 0.0, %v1278
    %v1280 = vpop.f32.mrf.mxu0
    %1281 = vmatprep.mubr.f32.mxu0 0.0
    %1282 = vmatmul.mubr.f32.gmra.mxu0 %v476
    %v1283 = vpop.f32.mrf.mxu0
    %v1284 = vadd.f32 0.0, %v1283
    %v1285 = vpop.f32.mrf.mxu0
    %1286 = vmatprep.mubr.f32.mxu0 0.0
    %1287 = vmatmul.mubr.f32.gmra.mxu0 %v477
    %v1288 = vpop.f32.mrf.mxu0
    %v1289 = vadd.f32 0.0, %v1288
    %v1290 = vpop.f32.mrf.mxu0
    %1291 = vmatprep.mubr.f32.mxu0 0.0
    %1292 = vmatmul.mubr.f32.gmra.mxu0 %v478
    %v1293 = vpop.f32.mrf.mxu0
    %v1294 = vadd.f32 0.0, %v1293
    %v1295 = vpop.f32.mrf.mxu0
    %1296 = vmatprep.mubr.f32.mxu0 0.0
    %1297 = vmatmul.mubr.f32.gmra.mxu0 %v479
    %v1298 = vpop.f32.mrf.mxu0
    %v1299 = vadd.f32 0.0, %v1298
    %v1300 = vpop.f32.mrf.mxu0
    %1301 = vmatprep.mubr.f32.mxu0 0.0
    %1302 = vmatmul.mubr.f32.gmra.mxu0 %v480
    %v1303 = vpop.f32.mrf.mxu0
    %v1304 = vadd.f32 0.0, %v1303
    %v1305 = vpop.f32.mrf.mxu0
    %1306 = vmatprep.mubr.f32.mxu0 0.0
    %1307 = vmatmul.mubr.f32.gmra.mxu0 %v481
    %v1308 = vpop.f32.mrf.mxu0
    %v1309 = vadd.f32 0.0, %v1308
    %v1310 = vpop.f32.mrf.mxu0
    %1311 = vmatprep.mubr.f32.mxu0 0.0
    %1312 = vmatmul.mubr.f32.gmra.mxu0 %v482
    %v1313 = vpop.f32.mrf.mxu0
    %v1314 = vadd.f32 0.0, %v1313
    %v1315 = vpop.f32.mrf.mxu0
    %1316 = vmatprep.mubr.f32.mxu0 0.0
    %1317 = vmatmul.mubr.f32.gmra.mxu0 %v483
    %v1318 = vpop.f32.mrf.mxu0
    %v1319 = vadd.f32 0.0, %v1318
    %v1320 = vpop.f32.mrf.mxu0
    %1321 = vmatprep.mubr.f32.mxu0 0.0
    %1322 = vmatmul.mubr.f32.gmra.mxu0 %v484
    %v1323 = vpop.f32.mrf.mxu0
    %v1324 = vadd.f32 0.0, %v1323
    %v1325 = vpop.f32.mrf.mxu0
    %1326 = vmatprep.mubr.f32.mxu0 0.0
    %1327 = vmatmul.mubr.f32.gmra.mxu0 %v485
    %v1328 = vpop.f32.mrf.mxu0
    %v1329 = vadd.f32 0.0, %v1328
    %v1330 = vpop.f32.mrf.mxu0
    %1331 = vmatprep.mubr.f32.mxu0 0.0
    %1332 = vmatmul.mubr.f32.gmra.mxu0 %v486
    %v1333 = vpop.f32.mrf.mxu0
    %v1334 = vadd.f32 0.0, %v1333
    %v1335 = vpop.f32.mrf.mxu0
    %1336 = vmatprep.mubr.f32.mxu0 0.0
    %1337 = vmatmul.mubr.f32.gmra.mxu0 %v487
    %v1338 = vpop.f32.mrf.mxu0
    %v1339 = vadd.f32 0.0, %v1338
    %v1340 = vpop.f32.mrf.mxu0
    %1341 = vmatprep.mubr.f32.mxu0 0.0
    %1342 = vmatmul.mubr.f32.gmra.mxu0 %v488
    %v1343 = vpop.f32.mrf.mxu0
    %v1344 = vadd.f32 0.0, %v1343
    %v1345 = vpop.f32.mrf.mxu0
    %1346 = vmatprep.mubr.f32.mxu0 0.0
    %1347 = vmatmul.mubr.f32.gmra.mxu0 %v489
    %v1348 = vpop.f32.mrf.mxu0
    %v1349 = vadd.f32 0.0, %v1348
    %v1350 = vpop.f32.mrf.mxu0
    %1351 = vmatprep.mubr.f32.mxu0 0.0
    %1352 = vmatmul.mubr.f32.gmra.mxu0 %v490
    %v1353 = vpop.f32.mrf.mxu0
    %v1354 = vadd.f32 0.0, %v1353
    %v1355 = vpop.f32.mrf.mxu0
    %1356 = vmatprep.mubr.f32.mxu0 0.0
    %1357 = vmatmul.mubr.f32.gmra.mxu0 %v491
    %v1358 = vpop.f32.mrf.mxu0
    %v1359 = vadd.f32 0.0, %v1358
    %v1360 = vpop.f32.mrf.mxu0
    %1361 = vmatprep.mubr.f32.mxu0 0.0
    %1362 = vmatmul.mubr.f32.gmra.mxu0 %v492
    %v1363 = vpop.f32.mrf.mxu0
    %v1364 = vadd.f32 0.0, %v1363
    %v1365 = vpop.f32.mrf.mxu0
    %1366 = vmatprep.mubr.f32.mxu0 0.0
    %1367 = vmatmul.mubr.f32.gmra.mxu0 %v493
    %v1368 = vpop.f32.mrf.mxu0
    %v1369 = vadd.f32 0.0, %v1368
    %v1370 = vpop.f32.mrf.mxu0
    %1371 = vmatprep.mubr.f32.mxu0 0.0
    %1372 = vmatmul.mubr.f32.gmra.mxu0 %v494
    %v1373 = vpop.f32.mrf.mxu0
    %v1374 = vadd.f32 0.0, %v1373
    %v1375 = vpop.f32.mrf.mxu0
    %1376 = vdwg.mxu0
    %v1377 = vadd.f32 %v239, %v610
    %v1378 = vadd.f32 %v240, %v612
    %v1379 = vadd.f32 %v241, %v1059
    %v1380 = vadd.f32 %v242, %v616
    %v1381 = vadd.f32 %v243, %v618
    %v1382 = vadd.f32 %v244, %v1064
    %v1383 = vadd.f32 %v245, %v622
    %v1384 = vadd.f32 %v246, %v624
    %v1385 = vadd.f32 %v247, %v1069
    %v1386 = vadd.f32 %v248, %v628
    %v1387 = vadd.f32 %v249, %v630
    %v1388 = vadd.f32 %v250, %v1074
    %v1389 = vadd.f32 %v251, %v634
    %v1390 = vadd.f32 %v252, %v636
    %v1391 = vadd.f32 %v253, %v1079
    %v1392 = vadd.f32 %v254, %v640
    %v1393 = vadd.f32 %v255, %v642
    %v1394 = vadd.f32 %v256, %v1084
    %v1395 = vadd.f32 %v257, %v646
    %v1396 = vadd.f32 %v258, %v648
    %v1397 = vadd.f32 %v259, %v1089
    %v1398 = vadd.f32 %v260, %v652
    %v1399 = vadd.f32 %v261, %v654
    %v1400 = vadd.f32 %v262, %v1094
    %v1401 = vadd.f32 %v263, %v658
    %v1402 = vadd.f32 %v264, %v660
    %v1403 = vadd.f32 %v265, %v1099
    %v1404 = vadd.f32 %v266, %v664
    %v1405 = vadd.f32 %v267, %v666
    %v1406 = vadd.f32 %v268, %v1104
    %v1407 = vadd.f32 %v269, %v670
    %v1408 = vadd.f32 %v270, %v672
    %v1409 = vadd.f32 %v271, %v1109
    %v1410 = vadd.f32 %v272, %v676
    %v1411 = vadd.f32 %v273, %v678
    %v1412 = vadd.f32 %v274, %v1114
    %v1413 = vadd.f32 %v275, %v682
    %v1414 = vadd.f32 %v276, %v684
    %v1415 = vadd.f32 %v277, %v1119
    %v1416 = vadd.f32 %v278, %v688
    %v1417 = vadd.f32 %v279, %v690
    %v1418 = vadd.f32 %v280, %v1124
    %v1419 = vadd.f32 %v281, %v694
    %v1420 = vadd.f32 %v282, %v696
    %v1421 = vadd.f32 %v283, %v1129
    %v1422 = vadd.f32 %v284, %v700
    %v1423 = vadd.f32 %v285, %v702
    %v1424 = vadd.f32 %v286, %v1134
    %v1425 = vadd.f32 %v287, %v706
    %v1426 = vadd.f32 %v288, %v708
    %v1427 = vadd.f32 %v289, %v1139
    %v1428 = vadd.f32 %v290, %v712
    %v1429 = vadd.f32 %v291, %v714
    %v1430 = vadd.f32 %v292, %v1144
    %v1431 = vadd.f32 %v293, %v718
    %v1432 = vadd.f32 %v294, %v720
    %v1433 = vadd.f32 %v295, %v1149
    %v1434 = vadd.f32 %v296, %v724
    %v1435 = vadd.f32 %v297, %v726
    %v1436 = vadd.f32 %v298, %v1154
    %v1437 = vadd.f32 %v299, %v730
    %v1438 = vadd.f32 %v300, %v732
    %v1439 = vadd.f32 %v301, %v1159
    %v1440 = vadd.f32 %v302, %v736
    %v1441 = vadd.f32 %v303, %v738
    %v1442 = vadd.f32 %v304, %v1164
    %v1443 = vadd.f32 %v305, %v742
    %v1444 = vadd.f32 %v306, %v744
    %v1445 = vadd.f32 %v307, %v1169
    %v1446 = vadd.f32 %v308, %v748
    %v1447 = vadd.f32 %v309, %v750
    %v1448 = vadd.f32 %v310, %v1174
    %v1449 = vadd.f32 %v311, %v754
    %v1450 = vadd.f32 %v312, %v756
    %v1451 = vadd.f32 %v313, %v1179
    %v1452 = vadd.f32 %v314, %v760
    %v1453 = vadd.f32 %v315, %v762
    %v1454 = vadd.f32 %v316, %v1184
    %v1455 = vadd.f32 %v317, %v766
    %v1456 = vadd.f32 %v318, %v768
    %v1457 = vadd.f32 %v319, %v1189
    %v1458 = vadd.f32 %v320, %v772
    %v1459 = vadd.f32 %v321, %v774
    %v1460 = vadd.f32 %v322, %v1194
    %v1461 = vadd.f32 %v323, %v778
    %v1462 = vadd.f32 %v324, %v780
    %v1463 = vadd.f32 %v325, %v1199
    %v1464 = vadd.f32 %v326, %v784
    %v1465 = vadd.f32 %v327, %v786
    %v1466 = vadd.f32 %v328, %v1204
    %v1467 = vadd.f32 %v329, %v790
    %v1468 = vadd.f32 %v330, %v792
    %v1469 = vadd.f32 %v331, %v1209
    %v1470 = vadd.f32 %v332, %v796
    %v1471 = vadd.f32 %v333, %v798
    %v1472 = vadd.f32 %v334, %v1214
    %v1473 = vadd.f32 %v335, %v802
    %v1474 = vadd.f32 %v336, %v804
    %v1475 = vadd.f32 %v337, %v1219
    %v1476 = vadd.f32 %v338, %v808
    %v1477 = vadd.f32 %v339, %v810
    %v1478 = vadd.f32 %v340, %v1224
    %v1479 = vadd.f32 %v341, %v814
    %v1480 = vadd.f32 %v342, %v816
    %v1481 = vadd.f32 %v343, %v1229
    %v1482 = vadd.f32 %v344, %v820
    %v1483 = vadd.f32 %v345, %v822
    %v1484 = vadd.f32 %v346, %v1234
    %v1485 = vadd.f32 %v347, %v826
    %v1486 = vadd.f32 %v348, %v828
    %v1487 = vadd.f32 %v349, %v1239
    %v1488 = vadd.f32 %v350, %v832
    %v1489 = vadd.f32 %v351, %v834
    %v1490 = vadd.f32 %v352, %v1244
    %v1491 = vadd.f32 %v353, %v838
    %v1492 = vadd.f32 %v354, %v840
    %v1493 = vadd.f32 %v355, %v1249
    %v1494 = vadd.f32 %v356, %v844
    %v1495 = vadd.f32 %v357, %v846
    %v1496 = vadd.f32 %v358, %v1254
    %v1497 = vadd.f32 %v359, %v850
    %v1498 = vadd.f32 %v360, %v852
    %v1499 = vadd.f32 %v361, %v1259
    %v1500 = vadd.f32 %v362, %v856
    %v1501 = vadd.f32 %v363, %v858
    %v1502 = vadd.f32 %v364, %v1264
    %v1503 = vadd.f32 %v365, %v862
    %v1504 = vadd.f32 %v366, %v864
    %v1505 = vadd.f32 %v367, %v1269
    %v1506 = vadd.f32 %v368, %v868
    %v1507 = vadd.f32 %v369, %v870
    %v1508 = vadd.f32 %v370, %v1274
    %v1509 = vadd.f32 %v371, %v874
    %v1510 = vadd.f32 %v372, %v876
    %v1511 = vadd.f32 %v373, %v1279
    %v1512 = vadd.f32 %v374, %v880
    %v1513 = vadd.f32 %v375, %v882
    %v1514 = vadd.f32 %v376, %v1284
    %v1515 = vadd.f32 %v377, %v886
    %v1516 = vadd.f32 %v378, %v888
    %v1517 = vadd.f32 %v379, %v1289
    %v1518 = vadd.f32 %v380, %v892
    %v1519 = vadd.f32 %v381, %v894
    %v1520 = vadd.f32 %v382, %v1294
    %v1521 = vadd.f32 %v383, %v898
    %v1522 = vadd.f32 %v384, %v900
    %v1523 = vadd.f32 %v385, %v1299
    %v1524 = vadd.f32 %v386, %v904
    %v1525 = vadd.f32 %v387, %v906
    %v1526 = vadd.f32 %v388, %v1304
    %v1527 = vadd.f32 %v389, %v910
    %v1528 = vadd.f32 %v390, %v912
    %v1529 = vadd.f32 %v391, %v1309
    %v1530 = vadd.f32 %v392, %v916
    %v1531 = vadd.f32 %v393, %v918
    %v1532 = vadd.f32 %v394, %v1314
    %v1533 = vadd.f32 %v395, %v922
    %v1534 = vadd.f32 %v396, %v924
    %v1535 = vadd.f32 %v397, %v1319
    %v1536 = vadd.f32 %v398, %v928
    %v1537 = vadd.f32 %v399, %v930
    %v1538 = vadd.f32 %v400, %v1324
    %v1539 = vadd.f32 %v401, %v934
    %v1540 = vadd.f32 %v402, %v936
    %v1541 = vadd.f32 %v403, %v1329
    %v1542 = vadd.f32 %v404, %v940
    %v1543 = vadd.f32 %v405, %v942
    %v1544 = vadd.f32 %v406, %v1334
    %v1545 = vadd.f32 %v407, %v946
    %v1546 = vadd.f32 %v408, %v948
    %v1547 = vadd.f32 %v409, %v1339
    %v1548 = vadd.f32 %v410, %v952
    %v1549 = vadd.f32 %v411, %v954
    %v1550 = vadd.f32 %v412, %v1344
    %v1551 = vadd.f32 %v413, %v958
    %v1552 = vadd.f32 %v414, %v960
    %v1553 = vadd.f32 %v415, %v1349
    %v1554 = vadd.f32 %v416, %v964
    %v1555 = vadd.f32 %v417, %v966
    %v1556 = vadd.f32 %v418, %v1354
    %v1557 = vadd.f32 %v419, %v970
    %v1558 = vadd.f32 %v420, %v972
    %v1559 = vadd.f32 %v421, %v1359
    %v1560 = vadd.f32 %v422, %v976
    %v1561 = vadd.f32 %v423, %v978
    %v1562 = vadd.f32 %v424, %v1364
    %v1563 = vadd.f32 %v425, %v982
    %v1564 = vadd.f32 %v426, %v984
    %v1565 = vadd.f32 %v427, %v1369
    %v1566 = vadd.f32 %v428, %v988
    %v1567 = vadd.f32 %v429, %v990
    %v1568 = vadd.f32 %v430, %v1374
    %1569 = vst [vmem:[#allocation2] sm:$0xff] %v1377
    %1570 = vst [vmem:[#allocation2 + $0x8] sm:$0xff] %v1378
    %1571 = vst [vmem:[#allocation2 + $0x10] sm:$0xff] %v1379
    %1572 = vst [vmem:[#allocation2 + $0x18] sm:$0xff] %v1380
    %1573 = vst [vmem:[#allocation2 + $0x20] sm:$0xff] %v1381
    %1574 = vst [vmem:[#allocation2 + $0x28] sm:$0xff] %v1382
    %1575 = vst [vmem:[#allocation2 + $0x30] sm:$0xff] %v1383
    %1576 = vst [vmem:[#allocation2 + $0x38] sm:$0xff] %v1384
    %1577 = vst [vmem:[#allocation2 + $0x40] sm:$0xff] %v1385
    %1578 = vst [vmem:[#allocation2 + $0x48] sm:$0xff] %v1386
    %1579 = vst [vmem:[#allocation2 + $0x50] sm:$0xff] %v1387
    %1580 = vst [vmem:[#allocation2 + $0x58] sm:$0xff] %v1388
    %1581 = vst [vmem:[#allocation2 + $0x60] sm:$0xff] %v1389
    %1582 = vst [vmem:[#allocation2 + $0x68] sm:$0xff] %v1390
    %1583 = vst [vmem:[#allocation2 + $0x70] sm:$0xff] %v1391
    %1584 = vst [vmem:[#allocation2 + $0x78] sm:$0xff] %v1392
    %1585 = vst [vmem:[#allocation2 + $0x80] sm:$0xff] %v1393
    %1586 = vst [vmem:[#allocation2 + $0x88] sm:$0xff] %v1394
    %1587 = vst [vmem:[#allocation2 + $0x90] sm:$0xff] %v1395
    %1588 = vst [vmem:[#allocation2 + $0x98] sm:$0xff] %v1396
    %1589 = vst [vmem:[#allocation2 + $0xa0] sm:$0xff] %v1397
    %1590 = vst [vmem:[#allocation2 + $0xa8] sm:$0xff] %v1398
    %1591 = vst [vmem:[#allocation2 + $0xb0] sm:$0xff] %v1399
    %1592 = vst [vmem:[#allocation2 + $0xb8] sm:$0xff] %v1400
    %1593 = vst [vmem:[#allocation2 + $0xc0] sm:$0xff] %v1401
    %1594 = vst [vmem:[#allocation2 + $0xc8] sm:$0xff] %v1402
    %1595 = vst [vmem:[#allocation2 + $0xd0] sm:$0xff] %v1403
    %1596 = vst [vmem:[#allocation2 + $0xd8] sm:$0xff] %v1404
    %1597 = vst [vmem:[#allocation2 + $0xe0] sm:$0xff] %v1405
    %1598 = vst [vmem:[#allocation2 + $0xe8] sm:$0xff] %v1406
    %1599 = vst [vmem:[#allocation2 + $0xf0] sm:$0xff] %v1407
    %1600 = vst [vmem:[#allocation2 + $0xf8] sm:$0xff] %v1408
    %1601 = vst [vmem:[#allocation2 + $0x100] sm:$0xff] %v1409
    %1602 = vst [vmem:[#allocation2 + $0x108] sm:$0xff] %v1410
    %1603 = vst [vmem:[#allocation2 + $0x110] sm:$0xff] %v1411
    %1604 = vst [vmem:[#allocation2 + $0x118] sm:$0xff] %v1412
    %1605 = vst [vmem:[#allocation2 + $0x120] sm:$0xff] %v1413
    %1606 = vst [vmem:[#allocation2 + $0x128] sm:$0xff] %v1414
    %1607 = vst [vmem:[#allocation2 + $0x130] sm:$0xff] %v1415
    %1608 = vst [vmem:[#allocation2 + $0x138] sm:$0xff] %v1416
    %1609 = vst [vmem:[#allocation2 + $0x140] sm:$0xff] %v1417
    %1610 = vst [vmem:[#allocation2 + $0x148] sm:$0xff] %v1418
    %1611 = vst [vmem:[#allocation2 + $0x150] sm:$0xff] %v1419
    %1612 = vst [vmem:[#allocation2 + $0x158] sm:$0xff] %v1420
    %1613 = vst [vmem:[#allocation2 + $0x160] sm:$0xff] %v1421
    %1614 = vst [vmem:[#allocation2 + $0x168] sm:$0xff] %v1422
    %1615 = vst [vmem:[#allocation2 + $0x170] sm:$0xff] %v1423
    %1616 = vst [vmem:[#allocation2 + $0x178] sm:$0xff] %v1424
    %1617 = vst [vmem:[#allocation2 + $0x180] sm:$0xff] %v1425
    %1618 = vst [vmem:[#allocation2 + $0x188] sm:$0xff] %v1426
    %1619 = vst [vmem:[#allocation2 + $0x190] sm:$0xff] %v1427
    %1620 = vst [vmem:[#allocation2 + $0x198] sm:$0xff] %v1428
    %1621 = vst [vmem:[#allocation2 + $0x1a0] sm:$0xff] %v1429
    %1622 = vst [vmem:[#allocation2 + $0x1a8] sm:$0xff] %v1430
    %1623 = vst [vmem:[#allocation2 + $0x1b0] sm:$0xff] %v1431
    %1624 = vst [vmem:[#allocation2 + $0x1b8] sm:$0xff] %v1432
    %1625 = vst [vmem:[#allocation2 + $0x1c0] sm:$0xff] %v1433
    %1626 = vst [vmem:[#allocation2 + $0x1c8] sm:$0xff] %v1434
    %1627 = vst [vmem:[#allocation2 + $0x1d0] sm:$0xff] %v1435
    %1628 = vst [vmem:[#allocation2 + $0x1d8] sm:$0xff] %v1436
    %1629 = vst [vmem:[#allocation2 + $0x1e0] sm:$0xff] %v1437
    %1630 = vst [vmem:[#allocation2 + $0x1e8] sm:$0xff] %v1438
    %1631 = vst [vmem:[#allocation2 + $0x1f0] sm:$0xff] %v1439
    %1632 = vst [vmem:[#allocation2 + $0x1f8] sm:$0xff] %v1440
    %1633 = vst [vmem:[#allocation2 + $0x200] sm:$0xff] %v1441
    %1634 = vst [vmem:[#allocation2 + $0x208] sm:$0xff] %v1442
    %1635 = vst [vmem:[#allocation2 + $0x210] sm:$0xff] %v1443
    %1636 = vst [vmem:[#allocation2 + $0x218] sm:$0xff] %v1444
    %1637 = vst [vmem:[#allocation2 + $0x220] sm:$0xff] %v1445
    %1638 = vst [vmem:[#allocation2 + $0x228] sm:$0xff] %v1446
    %1639 = vst [vmem:[#allocation2 + $0x230] sm:$0xff] %v1447
    %1640 = vst [vmem:[#allocation2 + $0x238] sm:$0xff] %v1448
    %1641 = vst [vmem:[#allocation2 + $0x240] sm:$0xff] %v1449
    %1642 = vst [vmem:[#allocation2 + $0x248] sm:$0xff] %v1450
    %1643 = vst [vmem:[#allocation2 + $0x250] sm:$0xff] %v1451
    %1644 = vst [vmem:[#allocation2 + $0x258] sm:$0xff] %v1452
    %1645 = vst [vmem:[#allocation2 + $0x260] sm:$0xff] %v1453
    %1646 = vst [vmem:[#allocation2 + $0x268] sm:$0xff] %v1454
    %1647 = vst [vmem:[#allocation2 + $0x270] sm:$0xff] %v1455
    %1648 = vst [vmem:[#allocation2 + $0x278] sm:$0xff] %v1456
    %1649 = vst [vmem:[#allocation2 + $0x280] sm:$0xff] %v1457
    %1650 = vst [vmem:[#allocation2 + $0x288] sm:$0xff] %v1458
    %1651 = vst [vmem:[#allocation2 + $0x290] sm:$0xff] %v1459
    %1652 = vst [vmem:[#allocation2 + $0x298] sm:$0xff] %v1460
    %1653 = vst [vmem:[#allocation2 + $0x2a0] sm:$0xff] %v1461
    %1654 = vst [vmem:[#allocation2 + $0x2a8] sm:$0xff] %v1462
    %1655 = vst [vmem:[#allocation2 + $0x2b0] sm:$0xff] %v1463
    %1656 = vst [vmem:[#allocation2 + $0x2b8] sm:$0xff] %v1464
    %1657 = vst [vmem:[#allocation2 + $0x2c0] sm:$0xff] %v1465
    %1658 = vst [vmem:[#allocation2 + $0x2c8] sm:$0xff] %v1466
    %1659 = vst [vmem:[#allocation2 + $0x2d0] sm:$0xff] %v1467
    %1660 = vst [vmem:[#allocation2 + $0x2d8] sm:$0xff] %v1468
    %1661 = vst [vmem:[#allocation2 + $0x2e0] sm:$0xff] %v1469
    %1662 = vst [vmem:[#allocation2 + $0x2e8] sm:$0xff] %v1470
    %1663 = vst [vmem:[#allocation2 + $0x2f0] sm:$0xff] %v1471
    %1664 = vst [vmem:[#allocation2 + $0x2f8] sm:$0xff] %v1472
    %1665 = vst [vmem:[#allocation2 + $0x300] sm:$0xff] %v1473
    %1666 = vst [vmem:[#allocation2 + $0x308] sm:$0xff] %v1474
    %1667 = vst [vmem:[#allocation2 + $0x310] sm:$0xff] %v1475
    %1668 = vst [vmem:[#allocation2 + $0x318] sm:$0xff] %v1476
    %1669 = vst [vmem:[#allocation2 + $0x320] sm:$0xff] %v1477
    %1670 = vst [vmem:[#allocation2 + $0x328] sm:$0xff] %v1478
    %1671 = vst [vmem:[#allocation2 + $0x330] sm:$0xff] %v1479
    %1672 = vst [vmem:[#allocation2 + $0x338] sm:$0xff] %v1480
    %1673 = vst [vmem:[#allocation2 + $0x340] sm:$0xff] %v1481
    %1674 = vst [vmem:[#allocation2 + $0x348] sm:$0xff] %v1482
    %1675 = vst [vmem:[#allocation2 + $0x350] sm:$0xff] %v1483
    %1676 = vst [vmem:[#allocation2 + $0x358] sm:$0xff] %v1484
    %1677 = vst [vmem:[#allocation2 + $0x360] sm:$0xff] %v1485
    %1678 = vst [vmem:[#allocation2 + $0x368] sm:$0xff] %v1486
    %1679 = vst [vmem:[#allocation2 + $0x370] sm:$0xff] %v1487
    %1680 = vst [vmem:[#allocation2 + $0x378] sm:$0xff] %v1488
    %1681 = vst [vmem:[#allocation2 + $0x380] sm:$0xff] %v1489
    %1682 = vst [vmem:[#allocation2 + $0x388] sm:$0xff] %v1490
    %1683 = vst [vmem:[#allocation2 + $0x390] sm:$0xff] %v1491
    %1684 = vst [vmem:[#allocation2 + $0x398] sm:$0xff] %v1492
    %1685 = vst [vmem:[#allocation2 + $0x3a0] sm:$0xff] %v1493
    %1686 = vst [vmem:[#allocation2 + $0x3a8] sm:$0xff] %v1494
    %1687 = vst [vmem:[#allocation2 + $0x3b0] sm:$0xff] %v1495
    %1688 = vst [vmem:[#allocation2 + $0x3b8] sm:$0xff] %v1496
    %1689 = vst [vmem:[#allocation2 + $0x3c0] sm:$0xff] %v1497
    %1690 = vst [vmem:[#allocation2 + $0x3c8] sm:$0xff] %v1498
    %1691 = vst [vmem:[#allocation2 + $0x3d0] sm:$0xff] %v1499
    %1692 = vst [vmem:[#allocation2 + $0x3d8] sm:$0xff] %v1500
    %1693 = vst [vmem:[#allocation2 + $0x3e0] sm:$0xff] %v1501
    %1694 = vst [vmem:[#allocation2 + $0x3e8] sm:$0xff] %v1502
    %1695 = vst [vmem:[#allocation2 + $0x3f0] sm:$0xff] %v1503
    %1696 = vst [vmem:[#allocation2 + $0x3f8] sm:$0xff] %v1504
    %1697 = vst [vmem:[#allocation2 + $0x400] sm:$0xff] %v1505
    %1698 = vst [vmem:[#allocation2 + $0x408] sm:$0xff] %v1506
    %1699 = vst [vmem:[#allocation2 + $0x410] sm:$0xff] %v1507
    %1700 = vst [vmem:[#allocation2 + $0x418] sm:$0xff] %v1508
    %1701 = vst [vmem:[#allocation2 + $0x420] sm:$0xff] %v1509
    %1702 = vst [vmem:[#allocation2 + $0x428] sm:$0xff] %v1510
    %1703 = vst [vmem:[#allocation2 + $0x430] sm:$0xff] %v1511
    %1704 = vst [vmem:[#allocation2 + $0x438] sm:$0xff] %v1512
    %1705 = vst [vmem:[#allocation2 + $0x440] sm:$0xff] %v1513
    %1706 = vst [vmem:[#allocation2 + $0x448] sm:$0xff] %v1514
    %1707 = vst [vmem:[#allocation2 + $0x450] sm:$0xff] %v1515
    %1708 = vst [vmem:[#allocation2 + $0x458] sm:$0xff] %v1516
    %1709 = vst [vmem:[#allocation2 + $0x460] sm:$0xff] %v1517
    %1710 = vst [vmem:[#allocation2 + $0x468] sm:$0xff] %v1518
    %1711 = vst [vmem:[#allocation2 + $0x470] sm:$0xff] %v1519
    %1712 = vst [vmem:[#allocation2 + $0x478] sm:$0xff] %v1520
    %1713 = vst [vmem:[#allocation2 + $0x480] sm:$0xff] %v1521
    %1714 = vst [vmem:[#allocation2 + $0x488] sm:$0xff] %v1522
    %1715 = vst [vmem:[#allocation2 + $0x490] sm:$0xff] %v1523
    %1716 = vst [vmem:[#allocation2 + $0x498] sm:$0xff] %v1524
    %1717 = vst [vmem:[#allocation2 + $0x4a0] sm:$0xff] %v1525
    %1718 = vst [vmem:[#allocation2 + $0x4a8] sm:$0xff] %v1526
    %1719 = vst [vmem:[#allocation2 + $0x4b0] sm:$0xff] %v1527
    %1720 = vst [vmem:[#allocation2 + $0x4b8] sm:$0xff] %v1528
    %1721 = vst [vmem:[#allocation2 + $0x4c0] sm:$0xff] %v1529
    %1722 = vst [vmem:[#allocation2 + $0x4c8] sm:$0xff] %v1530
    %1723 = vst [vmem:[#allocation2 + $0x4d0] sm:$0xff] %v1531
    %1724 = vst [vmem:[#allocation2 + $0x4d8] sm:$0xff] %v1532
    %1725 = vst [vmem:[#allocation2 + $0x4e0] sm:$0xff] %v1533
    %1726 = vst [vmem:[#allocation2 + $0x4e8] sm:$0xff] %v1534
    %1727 = vst [vmem:[#allocation2 + $0x4f0] sm:$0xff] %v1535
    %1728 = vst [vmem:[#allocation2 + $0x4f8] sm:$0xff] %v1536
    %1729 = vst [vmem:[#allocation2 + $0x500] sm:$0xff] %v1537
    %1730 = vst [vmem:[#allocation2 + $0x508] sm:$0xff] %v1538
    %1731 = vst [vmem:[#allocation2 + $0x510] sm:$0xff] %v1539
    %1732 = vst [vmem:[#allocation2 + $0x518] sm:$0xff] %v1540
    %1733 = vst [vmem:[#allocation2 + $0x520] sm:$0xff] %v1541
    %1734 = vst [vmem:[#allocation2 + $0x528] sm:$0xff] %v1542
    %1735 = vst [vmem:[#allocation2 + $0x530] sm:$0xff] %v1543
    %1736 = vst [vmem:[#allocation2 + $0x538] sm:$0xff] %v1544
    %1737 = vst [vmem:[#allocation2 + $0x540] sm:$0xff] %v1545
    %1738 = vst [vmem:[#allocation2 + $0x548] sm:$0xff] %v1546
    %1739 = vst [vmem:[#allocation2 + $0x550] sm:$0xff] %v1547
    %1740 = vst [vmem:[#allocation2 + $0x558] sm:$0xff] %v1548
    %1741 = vst [vmem:[#allocation2 + $0x560] sm:$0xff] %v1549
    %1742 = vst [vmem:[#allocation2 + $0x568] sm:$0xff] %v1550
    %1743 = vst [vmem:[#allocation2 + $0x570] sm:$0xff] %v1551
    %1744 = vst [vmem:[#allocation2 + $0x578] sm:$0xff] %v1552
    %1745 = vst [vmem:[#allocation2 + $0x580] sm:$0xff] %v1553
    %1746 = vst [vmem:[#allocation2 + $0x588] sm:$0xff] %v1554
    %1747 = vst [vmem:[#allocation2 + $0x590] sm:$0xff] %v1555
    %1748 = vst [vmem:[#allocation2 + $0x598] sm:$0xff] %v1556
    %1749 = vst [vmem:[#allocation2 + $0x5a0] sm:$0xff] %v1557
    %1750 = vst [vmem:[#allocation2 + $0x5a8] sm:$0xff] %v1558
    %1751 = vst [vmem:[#allocation2 + $0x5b0] sm:$0xff] %v1559
    %1752 = vst [vmem:[#allocation2 + $0x5b8] sm:$0xff] %v1560
    %1753 = vst [vmem:[#allocation2 + $0x5c0] sm:$0xff] %v1561
    %1754 = vst [vmem:[#allocation2 + $0x5c8] sm:$0xff] %v1562
    %1755 = vst [vmem:[#allocation2 + $0x5d0] sm:$0xff] %v1563
    %1756 = vst [vmem:[#allocation2 + $0x5d8] sm:$0xff] %v1564
    %1757 = vst [vmem:[#allocation2 + $0x5e0] sm:$0xff] %v1565
    %1758 = vst [vmem:[#allocation2 + $0x5e8] sm:$0xff] %v1566
    %1759 = vst [vmem:[#allocation2 + $0x5f0] sm:$0xff] %v1567
    %1760 = vst [vmem:[#allocation2 + $0x5f8] sm:$0xff] %v1568
    // Predicated region
    $region26: #{tpu_custom_call.1} parent=1 // pred_check
      %p1761 = pneg %p43
    $region27: #{tpu_custom_call.1} parent=1 // pred_check_branch
      %1763 = sbr.rel (%p1761) target = $region29
    $region28: #{tpu_custom_call.1} parent=1 // pred_region
      %v1764 = vld [vmem:[#allocation2] sm:$0xff]
      %v1765 = vld [vmem:[#allocation2 + $0x8] sm:$0xff]
      %v1766 = vld [vmem:[#allocation2 + $0x10] sm:$0xff]
      %v1767 = vld [vmem:[#allocation2 + $0x18] sm:$0xff]
      %v1768 = vld [vmem:[#allocation2 + $0x20] sm:$0xff]
      %v1769 = vld [vmem:[#allocation2 + $0x28] sm:$0xff]
      %v1770 = vld [vmem:[#allocation2 + $0x30] sm:$0xff]
      %v1771 = vld [vmem:[#allocation2 + $0x38] sm:$0xff]
      %v1772 = vld [vmem:[#allocation2 + $0x40] sm:$0xff]
      %v1773 = vld [vmem:[#allocation2 + $0x48] sm:$0xff]
      %v1774 = vld [vmem:[#allocation2 + $0x50] sm:$0xff]
      %v1775 = vld [vmem:[#allocation2 + $0x58] sm:$0xff]
      %v1776 = vld [vmem:[#allocation2 + $0x60] sm:$0xff]
      %v1777 = vld [vmem:[#allocation2 + $0x68] sm:$0xff]
      %v1778 = vld [vmem:[#allocation2 + $0x70] sm:$0xff]
      %v1779 = vld [vmem:[#allocation2 + $0x78] sm:$0xff]
      %v1780 = vld [vmem:[#allocation2 + $0x80] sm:$0xff]
      %v1781 = vld [vmem:[#allocation2 + $0x88] sm:$0xff]
      %v1782 = vld [vmem:[#allocation2 + $0x90] sm:$0xff]
      %v1783 = vld [vmem:[#allocation2 + $0x98] sm:$0xff]
      %v1784 = vld [vmem:[#allocation2 + $0xa0] sm:$0xff]
      %v1785 = vld [vmem:[#allocation2 + $0xa8] sm:$0xff]
      %v1786 = vld [vmem:[#allocation2 + $0xb0] sm:$0xff]
      %v1787 = vld [vmem:[#allocation2 + $0xb8] sm:$0xff]
      %v1788 = vld [vmem:[#allocation2 + $0xc0] sm:$0xff]
      %v1789 = vld [vmem:[#allocation2 + $0xc8] sm:$0xff]
      %v1790 = vld [vmem:[#allocation2 + $0xd0] sm:$0xff]
      %v1791 = vld [vmem:[#allocation2 + $0xd8] sm:$0xff]
      %v1792 = vld [vmem:[#allocation2 + $0xe0] sm:$0xff]
      %v1793 = vld [vmem:[#allocation2 + $0xe8] sm:$0xff]
      %v1794 = vld [vmem:[#allocation2 + $0xf0] sm:$0xff]
      %v1795 = vld [vmem:[#allocation2 + $0xf8] sm:$0xff]
      %v1796 = vld [vmem:[#allocation2 + $0x100] sm:$0xff]
      %v1797 = vld [vmem:[#allocation2 + $0x108] sm:$0xff]
      %v1798 = vld [vmem:[#allocation2 + $0x110] sm:$0xff]
      %v1799 = vld [vmem:[#allocation2 + $0x118] sm:$0xff]
      %v1800 = vld [vmem:[#allocation2 + $0x120] sm:$0xff]
      %v1801 = vld [vmem:[#allocation2 + $0x128] sm:$0xff]
      %v1802 = vld [vmem:[#allocation2 + $0x130] sm:$0xff]
      %v1803 = vld [vmem:[#allocation2 + $0x138] sm:$0xff]
      %v1804 = vld [vmem:[#allocation2 + $0x140] sm:$0xff]
      %v1805 = vld [vmem:[#allocation2 + $0x148] sm:$0xff]
      %v1806 = vld [vmem:[#allocation2 + $0x150] sm:$0xff]
      %v1807 = vld [vmem:[#allocation2 + $0x158] sm:$0xff]
      %v1808 = vld [vmem:[#allocation2 + $0x160] sm:$0xff]
      %v1809 = vld [vmem:[#allocation2 + $0x168] sm:$0xff]
      %v1810 = vld [vmem:[#allocation2 + $0x170] sm:$0xff]
      %v1811 = vld [vmem:[#allocation2 + $0x178] sm:$0xff]
      %v1812 = vld [vmem:[#allocation2 + $0x180] sm:$0xff]
      %v1813 = vld [vmem:[#allocation2 + $0x188] sm:$0xff]
      %v1814 = vld [vmem:[#allocation2 + $0x190] sm:$0xff]
      %v1815 = vld [vmem:[#allocation2 + $0x198] sm:$0xff]
      %v1816 = vld [vmem:[#allocation2 + $0x1a0] sm:$0xff]
      %v1817 = vld [vmem:[#allocation2 + $0x1a8] sm:$0xff]
      %v1818 = vld [vmem:[#allocation2 + $0x1b0] sm:$0xff]
      %v1819 = vld [vmem:[#allocation2 + $0x1b8] sm:$0xff]
      %v1820 = vld [vmem:[#allocation2 + $0x1c0] sm:$0xff]
      %v1821 = vld [vmem:[#allocation2 + $0x1c8] sm:$0xff]
      %v1822 = vld [vmem:[#allocation2 + $0x1d0] sm:$0xff]
      %v1823 = vld [vmem:[#allocation2 + $0x1d8] sm:$0xff]
      %v1824 = vld [vmem:[#allocation2 + $0x1e0] sm:$0xff]
      %v1825 = vld [vmem:[#allocation2 + $0x1e8] sm:$0xff]
      %v1826 = vld [vmem:[#allocation2 + $0x1f0] sm:$0xff]
      %v1827 = vld [vmem:[#allocation2 + $0x1f8] sm:$0xff]
      %v1828 = vld [vmem:[#allocation2 + $0x200] sm:$0xff]
      %v1829 = vld [vmem:[#allocation2 + $0x208] sm:$0xff]
      %v1830 = vld [vmem:[#allocation2 + $0x210] sm:$0xff]
      %v1831 = vld [vmem:[#allocation2 + $0x218] sm:$0xff]
      %v1832 = vld [vmem:[#allocation2 + $0x220] sm:$0xff]
      %v1833 = vld [vmem:[#allocation2 + $0x228] sm:$0xff]
      %v1834 = vld [vmem:[#allocation2 + $0x230] sm:$0xff]
      %v1835 = vld [vmem:[#allocation2 + $0x238] sm:$0xff]
      %v1836 = vld [vmem:[#allocation2 + $0x240] sm:$0xff]
      %v1837 = vld [vmem:[#allocation2 + $0x248] sm:$0xff]
      %v1838 = vld [vmem:[#allocation2 + $0x250] sm:$0xff]
      %v1839 = vld [vmem:[#allocation2 + $0x258] sm:$0xff]
      %v1840 = vld [vmem:[#allocation2 + $0x260] sm:$0xff]
      %v1841 = vld [vmem:[#allocation2 + $0x268] sm:$0xff]
      %v1842 = vld [vmem:[#allocation2 + $0x270] sm:$0xff]
      %v1843 = vld [vmem:[#allocation2 + $0x278] sm:$0xff]
      %v1844 = vld [vmem:[#allocation2 + $0x280] sm:$0xff]
      %v1845 = vld [vmem:[#allocation2 + $0x288] sm:$0xff]
      %v1846 = vld [vmem:[#allocation2 + $0x290] sm:$0xff]
      %v1847 = vld [vmem:[#allocation2 + $0x298] sm:$0xff]
      %v1848 = vld [vmem:[#allocation2 + $0x2a0] sm:$0xff]
      %v1849 = vld [vmem:[#allocation2 + $0x2a8] sm:$0xff]
      %v1850 = vld [vmem:[#allocation2 + $0x2b0] sm:$0xff]
      %v1851 = vld [vmem:[#allocation2 + $0x2b8] sm:$0xff]
      %v1852 = vld [vmem:[#allocation2 + $0x2c0] sm:$0xff]
      %v1853 = vld [vmem:[#allocation2 + $0x2c8] sm:$0xff]
      %v1854 = vld [vmem:[#allocation2 + $0x2d0] sm:$0xff]
      %v1855 = vld [vmem:[#allocation2 + $0x2d8] sm:$0xff]
      %v1856 = vld [vmem:[#allocation2 + $0x2e0] sm:$0xff]
      %v1857 = vld [vmem:[#allocation2 + $0x2e8] sm:$0xff]
      %v1858 = vld [vmem:[#allocation2 + $0x2f0] sm:$0xff]
      %v1859 = vld [vmem:[#allocation2 + $0x2f8] sm:$0xff]
      %v1860 = vld [vmem:[#allocation2 + $0x300] sm:$0xff]
      %v1861 = vld [vmem:[#allocation2 + $0x308] sm:$0xff]
      %v1862 = vld [vmem:[#allocation2 + $0x310] sm:$0xff]
      %v1863 = vld [vmem:[#allocation2 + $0x318] sm:$0xff]
      %v1864 = vld [vmem:[#allocation2 + $0x320] sm:$0xff]
      %v1865 = vld [vmem:[#allocation2 + $0x328] sm:$0xff]
      %v1866 = vld [vmem:[#allocation2 + $0x330] sm:$0xff]
      %v1867 = vld [vmem:[#allocation2 + $0x338] sm:$0xff]
      %v1868 = vld [vmem:[#allocation2 + $0x340] sm:$0xff]
      %v1869 = vld [vmem:[#allocation2 + $0x348] sm:$0xff]
      %v1870 = vld [vmem:[#allocation2 + $0x350] sm:$0xff]
      %v1871 = vld [vmem:[#allocation2 + $0x358] sm:$0xff]
      %v1872 = vld [vmem:[#allocation2 + $0x360] sm:$0xff]
      %v1873 = vld [vmem:[#allocation2 + $0x368] sm:$0xff]
      %v1874 = vld [vmem:[#allocation2 + $0x370] sm:$0xff]
      %v1875 = vld [vmem:[#allocation2 + $0x378] sm:$0xff]
      %v1876 = vld [vmem:[#allocation2 + $0x380] sm:$0xff]
      %v1877 = vld [vmem:[#allocation2 + $0x388] sm:$0xff]
      %v1878 = vld [vmem:[#allocation2 + $0x390] sm:$0xff]
      %v1879 = vld [vmem:[#allocation2 + $0x398] sm:$0xff]
      %v1880 = vld [vmem:[#allocation2 + $0x3a0] sm:$0xff]
      %v1881 = vld [vmem:[#allocation2 + $0x3a8] sm:$0xff]
      %v1882 = vld [vmem:[#allocation2 + $0x3b0] sm:$0xff]
      %v1883 = vld [vmem:[#allocation2 + $0x3b8] sm:$0xff]
      %v1884 = vld [vmem:[#allocation2 + $0x3c0] sm:$0xff]
      %v1885 = vld [vmem:[#allocation2 + $0x3c8] sm:$0xff]
      %v1886 = vld [vmem:[#allocation2 + $0x3d0] sm:$0xff]
      %v1887 = vld [vmem:[#allocation2 + $0x3d8] sm:$0xff]
      %v1888 = vld [vmem:[#allocation2 + $0x3e0] sm:$0xff]
      %v1889 = vld [vmem:[#allocation2 + $0x3e8] sm:$0xff]
      %v1890 = vld [vmem:[#allocation2 + $0x3f0] sm:$0xff]
      %v1891 = vld [vmem:[#allocation2 + $0x3f8] sm:$0xff]
      %v1892 = vld [vmem:[#allocation2 + $0x400] sm:$0xff]
      %v1893 = vld [vmem:[#allocation2 + $0x408] sm:$0xff]
      %v1894 = vld [vmem:[#allocation2 + $0x410] sm:$0xff]
      %v1895 = vld [vmem:[#allocation2 + $0x418] sm:$0xff]
      %v1896 = vld [vmem:[#allocation2 + $0x420] sm:$0xff]
      %v1897 = vld [vmem:[#allocation2 + $0x428] sm:$0xff]
      %v1898 = vld [vmem:[#allocation2 + $0x430] sm:$0xff]
      %v1899 = vld [vmem:[#allocation2 + $0x438] sm:$0xff]
      %v1900 = vld [vmem:[#allocation2 + $0x440] sm:$0xff]
      %v1901 = vld [vmem:[#allocation2 + $0x448] sm:$0xff]
      %v1902 = vld [vmem:[#allocation2 + $0x450] sm:$0xff]
      %v1903 = vld [vmem:[#allocation2 + $0x458] sm:$0xff]
      %v1904 = vld [vmem:[#allocation2 + $0x460] sm:$0xff]
      %v1905 = vld [vmem:[#allocation2 + $0x468] sm:$0xff]
      %v1906 = vld [vmem:[#allocation2 + $0x470] sm:$0xff]
      %v1907 = vld [vmem:[#allocation2 + $0x478] sm:$0xff]
      %v1908 = vld [vmem:[#allocation2 + $0x480] sm:$0xff]
      %v1909 = vld [vmem:[#allocation2 + $0x488] sm:$0xff]
      %v1910 = vld [vmem:[#allocation2 + $0x490] sm:$0xff]
      %v1911 = vld [vmem:[#allocation2 + $0x498] sm:$0xff]
      %v1912 = vld [vmem:[#allocation2 + $0x4a0] sm:$0xff]
      %v1913 = vld [vmem:[#allocation2 + $0x4a8] sm:$0xff]
      %v1914 = vld [vmem:[#allocation2 + $0x4b0] sm:$0xff]
      %v1915 = vld [vmem:[#allocation2 + $0x4b8] sm:$0xff]
      %v1916 = vld [vmem:[#allocation2 + $0x4c0] sm:$0xff]
      %v1917 = vld [vmem:[#allocation2 + $0x4c8] sm:$0xff]
      %v1918 = vld [vmem:[#allocation2 + $0x4d0] sm:$0xff]
      %v1919 = vld [vmem:[#allocation2 + $0x4d8] sm:$0xff]
      %v1920 = vld [vmem:[#allocation2 + $0x4e0] sm:$0xff]
      %v1921 = vld [vmem:[#allocation2 + $0x4e8] sm:$0xff]
      %v1922 = vld [vmem:[#allocation2 + $0x4f0] sm:$0xff]
      %v1923 = vld [vmem:[#allocation2 + $0x4f8] sm:$0xff]
      %v1924 = vld [vmem:[#allocation2 + $0x500] sm:$0xff]
      %v1925 = vld [vmem:[#allocation2 + $0x508] sm:$0xff]
      %v1926 = vld [vmem:[#allocation2 + $0x510] sm:$0xff]
      %v1927 = vld [vmem:[#allocation2 + $0x518] sm:$0xff]
      %v1928 = vld [vmem:[#allocation2 + $0x520] sm:$0xff]
      %v1929 = vld [vmem:[#allocation2 + $0x528] sm:$0xff]
      %v1930 = vld [vmem:[#allocation2 + $0x530] sm:$0xff]
      %v1931 = vld [vmem:[#allocation2 + $0x538] sm:$0xff]
      %v1932 = vld [vmem:[#allocation2 + $0x540] sm:$0xff]
      %v1933 = vld [vmem:[#allocation2 + $0x548] sm:$0xff]
      %v1934 = vld [vmem:[#allocation2 + $0x550] sm:$0xff]
      %v1935 = vld [vmem:[#allocation2 + $0x558] sm:$0xff]
      %v1936 = vld [vmem:[#allocation2 + $0x560] sm:$0xff]
      %v1937 = vld [vmem:[#allocation2 + $0x568] sm:$0xff]
      %v1938 = vld [vmem:[#allocation2 + $0x570] sm:$0xff]
      %v1939 = vld [vmem:[#allocation2 + $0x578] sm:$0xff]
      %v1940 = vld [vmem:[#allocation2 + $0x580] sm:$0xff]
      %v1941 = vld [vmem:[#allocation2 + $0x588] sm:$0xff]
      %v1942 = vld [vmem:[#allocation2 + $0x590] sm:$0xff]
      %v1943 = vld [vmem:[#allocation2 + $0x598] sm:$0xff]
      %v1944 = vld [vmem:[#allocation2 + $0x5a0] sm:$0xff]
      %v1945 = vld [vmem:[#allocation2 + $0x5a8] sm:$0xff]
      %v1946 = vld [vmem:[#allocation2 + $0x5b0] sm:$0xff]
      %v1947 = vld [vmem:[#allocation2 + $0x5b8] sm:$0xff]
      %v1948 = vld [vmem:[#allocation2 + $0x5c0] sm:$0xff]
      %v1949 = vld [vmem:[#allocation2 + $0x5c8] sm:$0xff]
      %v1950 = vld [vmem:[#allocation2 + $0x5d0] sm:$0xff]
      %v1951 = vld [vmem:[#allocation2 + $0x5d8] sm:$0xff]
      %v1952 = vld [vmem:[#allocation2 + $0x5e0] sm:$0xff]
      %v1953 = vld [vmem:[#allocation2 + $0x5e8] sm:$0xff]
      %v1954 = vld [vmem:[#allocation2 + $0x5f0] sm:$0xff]
      %v1955 = vld [vmem:[#allocation2 + $0x5f8] sm:$0xff]
      %v1956 = vld [vmem:[%s2] sm:$0x7]
      %v1958 = vlaneseq
      %v1959 = vshrl.u32 %v1958, 7
      %v1960 = vsub.s32 0, %v1959
      %v1961 = vrot.slane %v1956, %v1960
      %v1962 = vlaneseq
      %v1963 = vshrl.u32 %v1962, 7
      %v1964 = vsub.s32 1, %v1963
      %v1965 = vrot.slane %v1956, %v1964
      %v1966 = vlaneseq
      %v1967 = vshrl.u32 %v1966, 7
      %v1968 = vsub.s32 2, %v1967
      %v1969 = vrot.slane %v1956, %v1968
      %v1973 = vadd.f32 %v1764, %v1961
      %v1974 = vadd.f32 %v1765, %v1965
      %v1975 = vadd.f32 %v1766, %v1969
      %v1976 = vadd.f32 %v1767, %v1961
      %v1977 = vadd.f32 %v1768, %v1965
      %v1978 = vadd.f32 %v1769, %v1969
      %v1979 = vadd.f32 %v1770, %v1961
      %v1980 = vadd.f32 %v1771, %v1965
      %v1981 = vadd.f32 %v1772, %v1969
      %v1982 = vadd.f32 %v1773, %v1961
      %v1983 = vadd.f32 %v1774, %v1965
      %v1984 = vadd.f32 %v1775, %v1969
      %v1985 = vadd.f32 %v1776, %v1961
      %v1986 = vadd.f32 %v1777, %v1965
      %v1987 = vadd.f32 %v1778, %v1969
      %v1988 = vadd.f32 %v1779, %v1961
      %v1989 = vadd.f32 %v1780, %v1965
      %v1990 = vadd.f32 %v1781, %v1969
      %v1991 = vadd.f32 %v1782, %v1961
      %v1992 = vadd.f32 %v1783, %v1965
      %v1993 = vadd.f32 %v1784, %v1969
      %v1994 = vadd.f32 %v1785, %v1961
      %v1995 = vadd.f32 %v1786, %v1965
      %v1996 = vadd.f32 %v1787, %v1969
      %v1997 = vadd.f32 %v1788, %v1961
      %v1998 = vadd.f32 %v1789, %v1965
      %v1999 = vadd.f32 %v1790, %v1969
      %v2000 = vadd.f32 %v1791, %v1961
      %v2001 = vadd.f32 %v1792, %v1965
      %v2002 = vadd.f32 %v1793, %v1969
      %v2003 = vadd.f32 %v1794, %v1961
      %v2004 = vadd.f32 %v1795, %v1965
      %v2005 = vadd.f32 %v1796, %v1969
      %v2006 = vadd.f32 %v1797, %v1961
      %v2007 = vadd.f32 %v1798, %v1965
      %v2008 = vadd.f32 %v1799, %v1969
      %v2009 = vadd.f32 %v1800, %v1961
      %v2010 = vadd.f32 %v1801, %v1965
      %v2011 = vadd.f32 %v1802, %v1969
      %v2012 = vadd.f32 %v1803, %v1961
      %v2013 = vadd.f32 %v1804, %v1965
      %v2014 = vadd.f32 %v1805, %v1969
      %v2015 = vadd.f32 %v1806, %v1961
      %v2016 = vadd.f32 %v1807, %v1965
      %v2017 = vadd.f32 %v1808, %v1969
      %v2018 = vadd.f32 %v1809, %v1961
      %v2019 = vadd.f32 %v1810, %v1965
      %v2020 = vadd.f32 %v1811, %v1969
      %v2021 = vadd.f32 %v1812, %v1961
      %v2022 = vadd.f32 %v1813, %v1965
      %v2023 = vadd.f32 %v1814, %v1969
      %v2024 = vadd.f32 %v1815, %v1961
      %v2025 = vadd.f32 %v1816, %v1965
      %v2026 = vadd.f32 %v1817, %v1969
      %v2027 = vadd.f32 %v1818, %v1961
      %v2028 = vadd.f32 %v1819, %v1965
      %v2029 = vadd.f32 %v1820, %v1969
      %v2030 = vadd.f32 %v1821, %v1961
      %v2031 = vadd.f32 %v1822, %v1965
      %v2032 = vadd.f32 %v1823, %v1969
      %v2033 = vadd.f32 %v1824, %v1961
      %v2034 = vadd.f32 %v1825, %v1965
      %v2035 = vadd.f32 %v1826, %v1969
      %v2036 = vadd.f32 %v1827, %v1961
      %v2037 = vadd.f32 %v1828, %v1965
      %v2038 = vadd.f32 %v1829, %v1969
      %v2039 = vadd.f32 %v1830, %v1961
      %v2040 = vadd.f32 %v1831, %v1965
      %v2041 = vadd.f32 %v1832, %v1969
      %v2042 = vadd.f32 %v1833, %v1961
      %v2043 = vadd.f32 %v1834, %v1965
      %v2044 = vadd.f32 %v1835, %v1969
      %v2045 = vadd.f32 %v1836, %v1961
      %v2046 = vadd.f32 %v1837, %v1965
      %v2047 = vadd.f32 %v1838, %v1969
      %v2048 = vadd.f32 %v1839, %v1961
      %v2049 = vadd.f32 %v1840, %v1965
      %v2050 = vadd.f32 %v1841, %v1969
      %v2051 = vadd.f32 %v1842, %v1961
      %v2052 = vadd.f32 %v1843, %v1965
      %v2053 = vadd.f32 %v1844, %v1969
      %v2054 = vadd.f32 %v1845, %v1961
      %v2055 = vadd.f32 %v1846, %v1965
      %v2056 = vadd.f32 %v1847, %v1969
      %v2057 = vadd.f32 %v1848, %v1961
      %v2058 = vadd.f32 %v1849, %v1965
      %v2059 = vadd.f32 %v1850, %v1969
      %v2060 = vadd.f32 %v1851, %v1961
      %v2061 = vadd.f32 %v1852, %v1965
      %v2062 = vadd.f32 %v1853, %v1969
      %v2063 = vadd.f32 %v1854, %v1961
      %v2064 = vadd.f32 %v1855, %v1965
      %v2065 = vadd.f32 %v1856, %v1969
      %v2066 = vadd.f32 %v1857, %v1961
      %v2067 = vadd.f32 %v1858, %v1965
      %v2068 = vadd.f32 %v1859, %v1969
      %v2069 = vadd.f32 %v1860, %v1961
      %v2070 = vadd.f32 %v1861, %v1965
      %v2071 = vadd.f32 %v1862, %v1969
      %v2072 = vadd.f32 %v1863, %v1961
      %v2073 = vadd.f32 %v1864, %v1965
      %v2074 = vadd.f32 %v1865, %v1969
      %v2075 = vadd.f32 %v1866, %v1961
      %v2076 = vadd.f32 %v1867, %v1965
      %v2077 = vadd.f32 %v1868, %v1969
      %v2078 = vadd.f32 %v1869, %v1961
      %v2079 = vadd.f32 %v1870, %v1965
      %v2080 = vadd.f32 %v1871, %v1969
      %v2081 = vadd.f32 %v1872, %v1961
      %v2082 = vadd.f32 %v1873, %v1965
      %v2083 = vadd.f32 %v1874, %v1969
      %v2084 = vadd.f32 %v1875, %v1961
      %v2085 = vadd.f32 %v1876, %v1965
      %v2086 = vadd.f32 %v1877, %v1969
      %v2087 = vadd.f32 %v1878, %v1961
      %v2088 = vadd.f32 %v1879, %v1965
      %v2089 = vadd.f32 %v1880, %v1969
      %v2090 = vadd.f32 %v1881, %v1961
      %v2091 = vadd.f32 %v1882, %v1965
      %v2092 = vadd.f32 %v1883, %v1969
      %v2093 = vadd.f32 %v1884, %v1961
      %v2094 = vadd.f32 %v1885, %v1965
      %v2095 = vadd.f32 %v1886, %v1969
      %v2096 = vadd.f32 %v1887, %v1961
      %v2097 = vadd.f32 %v1888, %v1965
      %v2098 = vadd.f32 %v1889, %v1969
      %v2099 = vadd.f32 %v1890, %v1961
      %v2100 = vadd.f32 %v1891, %v1965
      %v2101 = vadd.f32 %v1892, %v1969
      %v2102 = vadd.f32 %v1893, %v1961
      %v2103 = vadd.f32 %v1894, %v1965
      %v2104 = vadd.f32 %v1895, %v1969
      %v2105 = vadd.f32 %v1896, %v1961
      %v2106 = vadd.f32 %v1897, %v1965
      %v2107 = vadd.f32 %v1898, %v1969
      %v2108 = vadd.f32 %v1899, %v1961
      %v2109 = vadd.f32 %v1900, %v1965
      %v2110 = vadd.f32 %v1901, %v1969
      %v2111 = vadd.f32 %v1902, %v1961
      %v2112 = vadd.f32 %v1903, %v1965
      %v2113 = vadd.f32 %v1904, %v1969
      %v2114 = vadd.f32 %v1905, %v1961
      %v2115 = vadd.f32 %v1906, %v1965
      %v2116 = vadd.f32 %v1907, %v1969
      %v2117 = vadd.f32 %v1908, %v1961
      %v2118 = vadd.f32 %v1909, %v1965
      %v2119 = vadd.f32 %v1910, %v1969
      %v2120 = vadd.f32 %v1911, %v1961
      %v2121 = vadd.f32 %v1912, %v1965
      %v2122 = vadd.f32 %v1913, %v1969
      %v2123 = vadd.f32 %v1914, %v1961
      %v2124 = vadd.f32 %v1915, %v1965
      %v2125 = vadd.f32 %v1916, %v1969
      %v2126 = vadd.f32 %v1917, %v1961
      %v2127 = vadd.f32 %v1918, %v1965
      %v2128 = vadd.f32 %v1919, %v1969
      %v2129 = vadd.f32 %v1920, %v1961
      %v2130 = vadd.f32 %v1921, %v1965
      %v2131 = vadd.f32 %v1922, %v1969
      %v2132 = vadd.f32 %v1923, %v1961
      %v2133 = vadd.f32 %v1924, %v1965
      %v2134 = vadd.f32 %v1925, %v1969
      %v2135 = vadd.f32 %v1926, %v1961
      %v2136 = vadd.f32 %v1927, %v1965
      %v2137 = vadd.f32 %v1928, %v1969
      %v2138 = vadd.f32 %v1929, %v1961
      %v2139 = vadd.f32 %v1930, %v1965
      %v2140 = vadd.f32 %v1931, %v1969
      %v2141 = vadd.f32 %v1932, %v1961
      %v2142 = vadd.f32 %v1933, %v1965
      %v2143 = vadd.f32 %v1934, %v1969
      %v2144 = vadd.f32 %v1935, %v1961
      %v2145 = vadd.f32 %v1936, %v1965
      %v2146 = vadd.f32 %v1937, %v1969
      %v2147 = vadd.f32 %v1938, %v1961
      %v2148 = vadd.f32 %v1939, %v1965
      %v2149 = vadd.f32 %v1940, %v1969
      %v2150 = vadd.f32 %v1941, %v1961
      %v2151 = vadd.f32 %v1942, %v1965
      %v2152 = vadd.f32 %v1943, %v1969
      %v2153 = vadd.f32 %v1944, %v1961
      %v2154 = vadd.f32 %v1945, %v1965
      %v2155 = vadd.f32 %v1946, %v1969
      %v2156 = vadd.f32 %v1947, %v1961
      %v2157 = vadd.f32 %v1948, %v1965
      %v2158 = vadd.f32 %v1949, %v1969
      %v2159 = vadd.f32 %v1950, %v1961
      %v2160 = vadd.f32 %v1951, %v1965
      %v2161 = vadd.f32 %v1952, %v1969
      %v2162 = vadd.f32 %v1953, %v1961
      %v2163 = vadd.f32 %v1954, %v1965
      %v2164 = vadd.f32 %v1955, %v1969
      %2165 = vst [vmem:[#allocation8] sm:$0xff] %v1973
      %2166 = vst [vmem:[#allocation8 + $0x8] sm:$0xff] %v1974
      %2167 = vst [vmem:[#allocation8 + $0x10] sm:$0xff] %v1975
      %2168 = vst [vmem:[#allocation8 + $0x18] sm:$0xff] %v1976
      %2169 = vst [vmem:[#allocation8 + $0x20] sm:$0xff] %v1977
      %2170 = vst [vmem:[#allocation8 + $0x28] sm:$0xff] %v1978
      %2171 = vst [vmem:[#allocation8 + $0x30] sm:$0xff] %v1979
      %2172 = vst [vmem:[#allocation8 + $0x38] sm:$0xff] %v1980
      %2173 = vst [vmem:[#allocation8 + $0x40] sm:$0xff] %v1981
      %2174 = vst [vmem:[#allocation8 + $0x48] sm:$0xff] %v1982
      %2175 = vst [vmem:[#allocation8 + $0x50] sm:$0xff] %v1983
      %2176 = vst [vmem:[#allocation8 + $0x58] sm:$0xff] %v1984
      %2177 = vst [vmem:[#allocation8 + $0x60] sm:$0xff] %v1985
      %2178 = vst [vmem:[#allocation8 + $0x68] sm:$0xff] %v1986
      %2179 = vst [vmem:[#allocation8 + $0x70] sm:$0xff] %v1987
      %2180 = vst [vmem:[#allocation8 + $0x78] sm:$0xff] %v1988
      %2181 = vst [vmem:[#allocation8 + $0x80] sm:$0xff] %v1989
      %2182 = vst [vmem:[#allocation8 + $0x88] sm:$0xff] %v1990
      %2183 = vst [vmem:[#allocation8 + $0x90] sm:$0xff] %v1991
      %2184 = vst [vmem:[#allocation8 + $0x98] sm:$0xff] %v1992
      %2185 = vst [vmem:[#allocation8 + $0xa0] sm:$0xff] %v1993
      %2186 = vst [vmem:[#allocation8 + $0xa8] sm:$0xff] %v1994
      %2187 = vst [vmem:[#allocation8 + $0xb0] sm:$0xff] %v1995
      %2188 = vst [vmem:[#allocation8 + $0xb8] sm:$0xff] %v1996
      %2189 = vst [vmem:[#allocation8 + $0xc0] sm:$0xff] %v1997
      %2190 = vst [vmem:[#allocation8 + $0xc8] sm:$0xff] %v1998
      %2191 = vst [vmem:[#allocation8 + $0xd0] sm:$0xff] %v1999
      %2192 = vst [vmem:[#allocation8 + $0xd8] sm:$0xff] %v2000
      %2193 = vst [vmem:[#allocation8 + $0xe0] sm:$0xff] %v2001
      %2194 = vst [vmem:[#allocation8 + $0xe8] sm:$0xff] %v2002
      %2195 = vst [vmem:[#allocation8 + $0xf0] sm:$0xff] %v2003
      %2196 = vst [vmem:[#allocation8 + $0xf8] sm:$0xff] %v2004
      %2197 = vst [vmem:[#allocation8 + $0x100] sm:$0xff] %v2005
      %2198 = vst [vmem:[#allocation8 + $0x108] sm:$0xff] %v2006
      %2199 = vst [vmem:[#allocation8 + $0x110] sm:$0xff] %v2007
      %2200 = vst [vmem:[#allocation8 + $0x118] sm:$0xff] %v2008
      %2201 = vst [vmem:[#allocation8 + $0x120] sm:$0xff] %v2009
      %2202 = vst [vmem:[#allocation8 + $0x128] sm:$0xff] %v2010
      %2203 = vst [vmem:[#allocation8 + $0x130] sm:$0xff] %v2011
      %2204 = vst [vmem:[#allocation8 + $0x138] sm:$0xff] %v2012
      %2205 = vst [vmem:[#allocation8 + $0x140] sm:$0xff] %v2013
      %2206 = vst [vmem:[#allocation8 + $0x148] sm:$0xff] %v2014
      %2207 = vst [vmem:[#allocation8 + $0x150] sm:$0xff] %v2015
      %2208 = vst [vmem:[#allocation8 + $0x158] sm:$0xff] %v2016
      %2209 = vst [vmem:[#allocation8 + $0x160] sm:$0xff] %v2017
      %2210 = vst [vmem:[#allocation8 + $0x168] sm:$0xff] %v2018
      %2211 = vst [vmem:[#allocation8 + $0x170] sm:$0xff] %v2019
      %2212 = vst [vmem:[#allocation8 + $0x178] sm:$0xff] %v2020
      %2213 = vst [vmem:[#allocation8 + $0x180] sm:$0xff] %v2021
      %2214 = vst [vmem:[#allocation8 + $0x188] sm:$0xff] %v2022
      %2215 = vst [vmem:[#allocation8 + $0x190] sm:$0xff] %v2023
      %2216 = vst [vmem:[#allocation8 + $0x198] sm:$0xff] %v2024
      %2217 = vst [vmem:[#allocation8 + $0x1a0] sm:$0xff] %v2025
      %2218 = vst [vmem:[#allocation8 + $0x1a8] sm:$0xff] %v2026
      %2219 = vst [vmem:[#allocation8 + $0x1b0] sm:$0xff] %v2027
      %2220 = vst [vmem:[#allocation8 + $0x1b8] sm:$0xff] %v2028
      %2221 = vst [vmem:[#allocation8 + $0x1c0] sm:$0xff] %v2029
      %2222 = vst [vmem:[#allocation8 + $0x1c8] sm:$0xff] %v2030
      %2223 = vst [vmem:[#allocation8 + $0x1d0] sm:$0xff] %v2031
      %2224 = vst [vmem:[#allocation8 + $0x1d8] sm:$0xff] %v2032
      %2225 = vst [vmem:[#allocation8 + $0x1e0] sm:$0xff] %v2033
      %2226 = vst [vmem:[#allocation8 + $0x1e8] sm:$0xff] %v2034
      %2227 = vst [vmem:[#allocation8 + $0x1f0] sm:$0xff] %v2035
      %2228 = vst [vmem:[#allocation8 + $0x1f8] sm:$0xff] %v2036
      %2229 = vst [vmem:[#allocation8 + $0x200] sm:$0xff] %v2037
      %2230 = vst [vmem:[#allocation8 + $0x208] sm:$0xff] %v2038
      %2231 = vst [vmem:[#allocation8 + $0x210] sm:$0xff] %v2039
      %2232 = vst [vmem:[#allocation8 + $0x218] sm:$0xff] %v2040
      %2233 = vst [vmem:[#allocation8 + $0x220] sm:$0xff] %v2041
      %2234 = vst [vmem:[#allocation8 + $0x228] sm:$0xff] %v2042
      %2235 = vst [vmem:[#allocation8 + $0x230] sm:$0xff] %v2043
      %2236 = vst [vmem:[#allocation8 + $0x238] sm:$0xff] %v2044
      %2237 = vst [vmem:[#allocation8 + $0x240] sm:$0xff] %v2045
      %2238 = vst [vmem:[#allocation8 + $0x248] sm:$0xff] %v2046
      %2239 = vst [vmem:[#allocation8 + $0x250] sm:$0xff] %v2047
      %2240 = vst [vmem:[#allocation8 + $0x258] sm:$0xff] %v2048
      %2241 = vst [vmem:[#allocation8 + $0x260] sm:$0xff] %v2049
      %2242 = vst [vmem:[#allocation8 + $0x268] sm:$0xff] %v2050
      %2243 = vst [vmem:[#allocation8 + $0x270] sm:$0xff] %v2051
      %2244 = vst [vmem:[#allocation8 + $0x278] sm:$0xff] %v2052
      %2245 = vst [vmem:[#allocation8 + $0x280] sm:$0xff] %v2053
      %2246 = vst [vmem:[#allocation8 + $0x288] sm:$0xff] %v2054
      %2247 = vst [vmem:[#allocation8 + $0x290] sm:$0xff] %v2055
      %2248 = vst [vmem:[#allocation8 + $0x298] sm:$0xff] %v2056
      %2249 = vst [vmem:[#allocation8 + $0x2a0] sm:$0xff] %v2057
      %2250 = vst [vmem:[#allocation8 + $0x2a8] sm:$0xff] %v2058
      %2251 = vst [vmem:[#allocation8 + $0x2b0] sm:$0xff] %v2059
      %2252 = vst [vmem:[#allocation8 + $0x2b8] sm:$0xff] %v2060
      %2253 = vst [vmem:[#allocation8 + $0x2c0] sm:$0xff] %v2061
      %2254 = vst [vmem:[#allocation8 + $0x2c8] sm:$0xff] %v2062
      %2255 = vst [vmem:[#allocation8 + $0x2d0] sm:$0xff] %v2063
      %2256 = vst [vmem:[#allocation8 + $0x2d8] sm:$0xff] %v2064
      %2257 = vst [vmem:[#allocation8 + $0x2e0] sm:$0xff] %v2065
      %2258 = vst [vmem:[#allocation8 + $0x2e8] sm:$0xff] %v2066
      %2259 = vst [vmem:[#allocation8 + $0x2f0] sm:$0xff] %v2067
      %2260 = vst [vmem:[#allocation8 + $0x2f8] sm:$0xff] %v2068
      %2261 = vst [vmem:[#allocation8 + $0x300] sm:$0xff] %v2069
      %2262 = vst [vmem:[#allocation8 + $0x308] sm:$0xff] %v2070
      %2263 = vst [vmem:[#allocation8 + $0x310] sm:$0xff] %v2071
      %2264 = vst [vmem:[#allocation8 + $0x318] sm:$0xff] %v2072
      %2265 = vst [vmem:[#allocation8 + $0x320] sm:$0xff] %v2073
      %2266 = vst [vmem:[#allocation8 + $0x328] sm:$0xff] %v2074
      %2267 = vst [vmem:[#allocation8 + $0x330] sm:$0xff] %v2075
      %2268 = vst [vmem:[#allocation8 + $0x338] sm:$0xff] %v2076
      %2269 = vst [vmem:[#allocation8 + $0x340] sm:$0xff] %v2077
      %2270 = vst [vmem:[#allocation8 + $0x348] sm:$0xff] %v2078
      %2271 = vst [vmem:[#allocation8 + $0x350] sm:$0xff] %v2079
      %2272 = vst [vmem:[#allocation8 + $0x358] sm:$0xff] %v2080
      %2273 = vst [vmem:[#allocation8 + $0x360] sm:$0xff] %v2081
      %2274 = vst [vmem:[#allocation8 + $0x368] sm:$0xff] %v2082
      %2275 = vst [vmem:[#allocation8 + $0x370] sm:$0xff] %v2083
      %2276 = vst [vmem:[#allocation8 + $0x378] sm:$0xff] %v2084
      %2277 = vst [vmem:[#allocation8 + $0x380] sm:$0xff] %v2085
      %2278 = vst [vmem:[#allocation8 + $0x388] sm:$0xff] %v2086
      %2279 = vst [vmem:[#allocation8 + $0x390] sm:$0xff] %v2087
      %2280 = vst [vmem:[#allocation8 + $0x398] sm:$0xff] %v2088
      %2281 = vst [vmem:[#allocation8 + $0x3a0] sm:$0xff] %v2089
      %2282 = vst [vmem:[#allocation8 + $0x3a8] sm:$0xff] %v2090
      %2283 = vst [vmem:[#allocation8 + $0x3b0] sm:$0xff] %v2091
      %2284 = vst [vmem:[#allocation8 + $0x3b8] sm:$0xff] %v2092
      %2285 = vst [vmem:[#allocation8 + $0x3c0] sm:$0xff] %v2093
      %2286 = vst [vmem:[#allocation8 + $0x3c8] sm:$0xff] %v2094
      %2287 = vst [vmem:[#allocation8 + $0x3d0] sm:$0xff] %v2095
      %2288 = vst [vmem:[#allocation8 + $0x3d8] sm:$0xff] %v2096
      %2289 = vst [vmem:[#allocation8 + $0x3e0] sm:$0xff] %v2097
      %2290 = vst [vmem:[#allocation8 + $0x3e8] sm:$0xff] %v2098
      %2291 = vst [vmem:[#allocation8 + $0x3f0] sm:$0xff] %v2099
      %2292 = vst [vmem:[#allocation8 + $0x3f8] sm:$0xff] %v2100
      %2293 = vst [vmem:[#allocation8 + $0x400] sm:$0xff] %v2101
      %2294 = vst [vmem:[#allocation8 + $0x408] sm:$0xff] %v2102
      %2295 = vst [vmem:[#allocation8 + $0x410] sm:$0xff] %v2103
      %2296 = vst [vmem:[#allocation8 + $0x418] sm:$0xff] %v2104
      %2297 = vst [vmem:[#allocation8 + $0x420] sm:$0xff] %v2105
      %2298 = vst [vmem:[#allocation8 + $0x428] sm:$0xff] %v2106
      %2299 = vst [vmem:[#allocation8 + $0x430] sm:$0xff] %v2107
      %2300 = vst [vmem:[#allocation8 + $0x438] sm:$0xff] %v2108
      %2301 = vst [vmem:[#allocation8 + $0x440] sm:$0xff] %v2109
      %2302 = vst [vmem:[#allocation8 + $0x448] sm:$0xff] %v2110
      %2303 = vst [vmem:[#allocation8 + $0x450] sm:$0xff] %v2111
      %2304 = vst [vmem:[#allocation8 + $0x458] sm:$0xff] %v2112
      %2305 = vst [vmem:[#allocation8 + $0x460] sm:$0xff] %v2113
      %2306 = vst [vmem:[#allocation8 + $0x468] sm:$0xff] %v2114
      %2307 = vst [vmem:[#allocation8 + $0x470] sm:$0xff] %v2115
      %2308 = vst [vmem:[#allocation8 + $0x478] sm:$0xff] %v2116
      %2309 = vst [vmem:[#allocation8 + $0x480] sm:$0xff] %v2117
      %2310 = vst [vmem:[#allocation8 + $0x488] sm:$0xff] %v2118
      %2311 = vst [vmem:[#allocation8 + $0x490] sm:$0xff] %v2119
      %2312 = vst [vmem:[#allocation8 + $0x498] sm:$0xff] %v2120
      %2313 = vst [vmem:[#allocation8 + $0x4a0] sm:$0xff] %v2121
      %2314 = vst [vmem:[#allocation8 + $0x4a8] sm:$0xff] %v2122
      %2315 = vst [vmem:[#allocation8 + $0x4b0] sm:$0xff] %v2123
      %2316 = vst [vmem:[#allocation8 + $0x4b8] sm:$0xff] %v2124
      %2317 = vst [vmem:[#allocation8 + $0x4c0] sm:$0xff] %v2125
      %2318 = vst [vmem:[#allocation8 + $0x4c8] sm:$0xff] %v2126
      %2319 = vst [vmem:[#allocation8 + $0x4d0] sm:$0xff] %v2127
      %2320 = vst [vmem:[#allocation8 + $0x4d8] sm:$0xff] %v2128
      %2321 = vst [vmem:[#allocation8 + $0x4e0] sm:$0xff] %v2129
      %2322 = vst [vmem:[#allocation8 + $0x4e8] sm:$0xff] %v2130
      %2323 = vst [vmem:[#allocation8 + $0x4f0] sm:$0xff] %v2131
      %2324 = vst [vmem:[#allocation8 + $0x4f8] sm:$0xff] %v2132
      %2325 = vst [vmem:[#allocation8 + $0x500] sm:$0xff] %v2133
      %2326 = vst [vmem:[#allocation8 + $0x508] sm:$0xff] %v2134
      %2327 = vst [vmem:[#allocation8 + $0x510] sm:$0xff] %v2135
      %2328 = vst [vmem:[#allocation8 + $0x518] sm:$0xff] %v2136
      %2329 = vst [vmem:[#allocation8 + $0x520] sm:$0xff] %v2137
      %2330 = vst [vmem:[#allocation8 + $0x528] sm:$0xff] %v2138
      %2331 = vst [vmem:[#allocation8 + $0x530] sm:$0xff] %v2139
      %2332 = vst [vmem:[#allocation8 + $0x538] sm:$0xff] %v2140
      %2333 = vst [vmem:[#allocation8 + $0x540] sm:$0xff] %v2141
      %2334 = vst [vmem:[#allocation8 + $0x548] sm:$0xff] %v2142
      %2335 = vst [vmem:[#allocation8 + $0x550] sm:$0xff] %v2143
      %2336 = vst [vmem:[#allocation8 + $0x558] sm:$0xff] %v2144
      %2337 = vst [vmem:[#allocation8 + $0x560] sm:$0xff] %v2145
      %2338 = vst [vmem:[#allocation8 + $0x568] sm:$0xff] %v2146
      %2339 = vst [vmem:[#allocation8 + $0x570] sm:$0xff] %v2147
      %2340 = vst [vmem:[#allocation8 + $0x578] sm:$0xff] %v2148
      %2341 = vst [vmem:[#allocation8 + $0x580] sm:$0xff] %v2149
      %2342 = vst [vmem:[#allocation8 + $0x588] sm:$0xff] %v2150
      %2343 = vst [vmem:[#allocation8 + $0x590] sm:$0xff] %v2151
      %2344 = vst [vmem:[#allocation8 + $0x598] sm:$0xff] %v2152
      %2345 = vst [vmem:[#allocation8 + $0x5a0] sm:$0xff] %v2153
      %2346 = vst [vmem:[#allocation8 + $0x5a8] sm:$0xff] %v2154
      %2347 = vst [vmem:[#allocation8 + $0x5b0] sm:$0xff] %v2155
      %2348 = vst [vmem:[#allocation8 + $0x5b8] sm:$0xff] %v2156
      %2349 = vst [vmem:[#allocation8 + $0x5c0] sm:$0xff] %v2157
      %2350 = vst [vmem:[#allocation8 + $0x5c8] sm:$0xff] %v2158
      %2351 = vst [vmem:[#allocation8 + $0x5d0] sm:$0xff] %v2159
      %2352 = vst [vmem:[#allocation8 + $0x5d8] sm:$0xff] %v2160
      %2353 = vst [vmem:[#allocation8 + $0x5e0] sm:$0xff] %v2161
      %2354 = vst [vmem:[#allocation8 + $0x5e8] sm:$0xff] %v2162
      %2355 = vst [vmem:[#allocation8 + $0x5f0] sm:$0xff] %v2163
      %2356 = vst [vmem:[#allocation8 + $0x5f8] sm:$0xff] %v2164
    $region29: #{tpu_custom_call.1} parent=1 // pred_fallthru
      _
    // Predicated region
    $region30: #{tpu_custom_call.1} parent=1 // pred_check
      _
    $region31: #{tpu_custom_call.1} parent=1 // pred_check_branch
      %2358 = sbr.rel (0) target = $region33
    $region32: #{tpu_custom_call.1} parent=1 // pred_region
      %s2360 = ssub.s32 24576, 24576
      %2361 = vsyncadd [#allocation5], %s2360
      %s2362 = sshll.u32 [#allocation8], 4
      %s2363 = int_to_ptr.vmem [resolvable:$true] %s2362
      %2368 = dma.vmem_to_hbm [thread:$0]  %s2363, 24576, %s3, [#allocation5], 384, 384, 24
    $region33: #{tpu_custom_call.1} parent=1 // pred_fallthru
      _
    // Predicated region
    $region34: #{tpu_custom_call.1} parent=1 // pred_check
      _
    $region35: #{tpu_custom_call.1} parent=1 // pred_check_branch
      %2370 = sbr.rel (0) target = $region37
    $region36: #{tpu_custom_call.1} parent=1 // pred_region
      %2371 = dma.done [#allocation5], 24576
    $region37: #{tpu_custom_call.1} parent=1 // pred_fallthru
      _
    %2372 = vsyncpa [#allocation4], 1
    %2373 = vsyncpa [#allocation7], 1
    %2374 = vsyncpa [#allocation5], 1

</llo_original>
